<compile_context>
chip_gen: v7x
topology: tpu7x:2x2x1
jax: 0.10.0
libtpu: 0.0.40
codegen_flags: <defaults>
</compile_context>

<pallas_src>
import jax
import jax.numpy as jnp
from jax.experimental import pallas as pl
from jax.experimental.pallas import tpu as pltpu


def _tree_sum(vals):
    """Balanced-tree sum of a Python list of arrays (shortens the add chain)."""
    while len(vals) > 1:
        nxt = [vals[i] + vals[i + 1] for i in range(0, len(vals) - 1, 2)]
        if len(vals) % 2:
            nxt.append(vals[-1])
        vals = nxt
    return vals[0]


# ---------------------------------------------------------------------------
# Pallas kernel: hoisted input projection + 1-layer LSTM recurrence + fused
# output projection (the hot path of Network.forward).
# ---------------------------------------------------------------------------
def _network_kernel(emb_ref,     # (T*B, E)  time-major flattened embedded seq
                    h0_ref,      # (B, H)    initial hidden state
                    c0_ref,      # (B, H)    initial cell state
                    wih_ref,     # (E, 4H)   input->gates weights, gates [i,f,o,g]
                    whh_ref,     # (H, 4H)   hidden->gates weights, gates [i,f,o,g]
                    b_ref,       # (1, 4H)   b_ih + b_hh, gates [i,f,o,g]
                    wf_ref,      # (H, Vp)   fused linear_1->linear_2 weight
                    bf_ref,      # (1, Vp)   fused bias
                    logits_ref,  # (B, Vp)
                    h_out_ref,   # (B, H)
                    c_out_ref):  # (B, H)
    B, H = h0_ref.shape
    T = emb_ref.shape[0] // B

    # ---- hoisted input projection: one batched matmul over the whole sequence,
    # bias folded in (both are independent of the recurrent state).
    proj = (jnp.dot(emb_ref[...], wih_ref[...],
                    preferred_element_type=jnp.float32)
            + b_ref[...])                                        # (T*B, 4H)

    # ---- recurrent weights, pre-sliced per contraction row (hoisted out of
    # the loop; static sublane slices of a loaded value are free views).
    whh = whh_ref[...]                                           # (H, 4H)
    whh_rows = [whh[k:k + 1, :] for k in range(H)]               # each (1, 4H)

    h = h0_ref[...]
    c = c0_ref[...]

    # Fully unrolled recurrence: T is static & small and the live state (h, c)
    # is tiny, so full unrolling maximizes LLO scheduling freedom without any
    # register-pressure risk.
    for t in range(T):
        x_t = proj[t * B:(t + 1) * B, :]                         # (B, 4H), indep. of h
        # h @ W_hh as VPU broadcast-MACs (K = H); tree-summed to shorten the
        # serial dependency chain.  No MXU round trip inside the loop.
        prods = [h[:, k:k + 1] * whh_rows[k] for k in range(H)]
        gates = x_t + _tree_sum(prods)                           # (B, 4H)

        ifo = jax.nn.sigmoid(gates[:, 0:3 * H])                  # i | f | o, one EUP pass
        g_g = jnp.tanh(gates[:, 3 * H:4 * H])
        i_g = ifo[:, 0:H]
        f_g = ifo[:, H:2 * H]
        o_g = ifo[:, 2 * H:3 * H]
        c = f_g * c + i_g * g_g
        h = o_g * jnp.tanh(c)

    h_out_ref[...] = h
    c_out_ref[...] = c

    # num_layers == 1  ->  h.mean(dim=0) == h.  linear_1/linear_2 are fused at
    # init into a single lane-dense (H, Vp) matmul, so the epilogue is one MXU
    # op + one bias add and the logits store is an unmasked full-lane vst.
    logits_ref[...] = (jnp.dot(h, wf_ref[...],
                               preferred_element_type=jnp.float32)
                       + bf_ref[...])


def _run_kernel(emb2d, h0, c0, wih, whh, b, wf, bf):
    B, H = h0.shape
    TB, E = emb2d.shape
    G = wih.shape[1]
    Vp = wf.shape[1]

    vmem = pl.BlockSpec(memory_space=pltpu.MemorySpace.VMEM)

    # Advisory cost estimate (helps XLA schedule the surrounding gather /
    # transpose around the custom call; kernel is far below VMEM limits).
    flops = 2 * TB * E * G + 2 * TB * H * G + 2 * B * H * Vp
    transcendentals = TB * (G + H)
    bytes_accessed = 4 * (emb2d.size + h0.size + c0.size + wih.size + whh.size
                          + b.size + wf.size + bf.size + B * Vp + 2 * B * H)

    return pl.pallas_call(
        _network_kernel,
        out_shape=(
            jax.ShapeDtypeStruct((B, Vp), jnp.float32),   # logits (lane-padded)
            jax.ShapeDtypeStruct((B, H), jnp.float32),    # h
            jax.ShapeDtypeStruct((B, H), jnp.float32),    # c
        ),
        in_specs=[vmem] * 8,
        out_specs=(vmem, vmem, vmem),
        cost_estimate=pl.CostEstimate(flops=flops,
                                      transcendentals=transcendentals,
                                      bytes_accessed=bytes_accessed),
    )(emb2d, h0, c0, wih, whh, b, wf, bf)


# ---------------------------------------------------------------------------
# Parameter setup (deterministic, mimics PyTorch module shapes / init)
# ---------------------------------------------------------------------------
def init_params(key, vocab_size, embedding_dim=2, dense_dim=32, hidden_dim=8,
                max_norm=2.0):
    ks = jax.random.split(key, 9)
    H, E, D, V = hidden_dim, embedding_dim, dense_dim, vocab_size

    # Embedding: N(0,1) init, padding_idx = V-1 zeroed, max_norm (p=2) renorm.
    # (PyTorch renormalizes lazily at lookup time; doing it to all rows at init
    #  is equivalent for this forward pass.)
    emb = jax.random.normal(ks[0], (V, E), jnp.float32)
    norms = jnp.linalg.norm(emb, axis=1, keepdims=True)
    scale = jnp.where(norms > max_norm, max_norm / (norms + 1e-7), 1.0)
    emb = emb * scale
    emb = emb.at[V - 1].set(0.0)

    # LSTM params, PyTorch layout (4H, in) with gate blocks [i, f, g, o].
    k = 1.0 / jnp.sqrt(jnp.float32(H))
    w_ih = jax.random.uniform(ks[1], (4 * H, E), jnp.float32, -k, k)
    w_hh = jax.random.uniform(ks[2], (4 * H, H), jnp.float32, -k, k)
    b_ih = jax.random.uniform(ks[3], (4 * H,), jnp.float32, -k, k)
    b_hh = jax.random.uniform(ks[4], (4 * H,), jnp.float32, -k, k)

    # Permute gate blocks [i, f, g, o] -> [i, f, o, g] (kernel layout).
    perm = jnp.concatenate([
        jnp.arange(0 * H, 1 * H),   # i
        jnp.arange(1 * H, 2 * H),   # f
        jnp.arange(3 * H, 4 * H),   # o
        jnp.arange(2 * H, 3 * H),   # g
    ])
    w_ih = w_ih[perm]
    w_hh = w_hh[perm]
    b = (b_ih + b_hh)[perm]

    # Linear layers, PyTorch layout (out, in).
    k1 = 1.0 / jnp.sqrt(jnp.float32(H))
    w1 = jax.random.uniform(ks[5], (D, H), jnp.float32, -k1, k1)
    b1 = jax.random.uniform(ks[6], (D,), jnp.float32, -k1, k1)
    k2 = 1.0 / jnp.sqrt(jnp.float32(D))
    w2 = jax.random.uniform(ks[7], (V, D), jnp.float32, -k2, k2)
    b2 = jax.random.uniform(ks[8], (V,), jnp.float32, -k2, k2)

    # Algebraic fusion (no nonlinearity between linear_1 and linear_2):
    #   logits = (h @ W1^T + b1) @ W2^T + b2 = h @ (W1^T W2^T) + (b1 @ W2^T + b2)
    w_fused = jnp.transpose(w1) @ jnp.transpose(w2)              # (H, V)
    b_fused = b1 @ jnp.transpose(w2) + b2                        # (V,)

    # Pad V up to 128 lanes so the logits store is lane-dense; padded columns
    # are exactly zero and are sliced off in the wrapper.
    Vp = max(128, ((V + 127) // 128) * 128)
    w_fused = jnp.pad(w_fused, ((0, 0), (0, Vp - V)))
    b_fused = jnp.pad(b_fused, (0, Vp - V))

    return dict(
        embedding=emb,
        wih=jnp.transpose(w_ih),            # (E, 4H), gates [i,f,o,g]
        whh=jnp.transpose(w_hh),            # (H, 4H), gates [i,f,o,g]
        b=b.reshape(1, 4 * H),              # (1, 4H), gates [i,f,o,g]
        w_fused=w_fused,                    # (H, Vp)
        b_fused=b_fused.reshape(1, Vp),     # (1, Vp)
    )


# ---------------------------------------------------------------------------
# Forward pass matching Network.forward(x, h=None, c=None)
# ---------------------------------------------------------------------------
@jax.jit
def network_forward(params, x, h=None, c=None):
    B, T = x.shape
    H = params["whh"].shape[0]
    V = params["embedding"].shape[0]

    # Embedding lookup (integer gather) -- glue, done in plain JAX.
    emb = jnp.take(params["embedding"], x, axis=0)               # (B, T, E)
    # Time-major, flattened so the kernel's hoisted input projection is a
    # single 2-D matmul.
    emb2d = jnp.transpose(emb, (1, 0, 2)).reshape(T * B, -1).astype(jnp.float32)

    if h is not None and c is not None:
        h0 = h[0].astype(jnp.float32)   # (num_layers=1, B, H) -> (B, H)
        c0 = c[0].astype(jnp.float32)
    else:
        h0 = jnp.zeros((B, H), jnp.float32)
        c0 = jnp.zeros((B, H), jnp.float32)

    logits_p, h_out, c_out = _run_kernel(
        emb2d, h0, c0,
        params["wih"], params["whh"], params["b"],
        params["w_fused"], params["b_fused"])

    logits = logits_p[:, :V]                 # drop lane padding
    # PyTorch returns h, c with shape (num_layers, B, H).
    return logits, h_out[None, :, :], c_out[None, :, :]


if __name__ == "__main__":
    vocab_size = 16
    batch, seq = 2, 8

    key = jax.random.PRNGKey(0)
    pkey, xkey = jax.random.split(key)
    params = init_params(pkey, vocab_size)

    x = jax.random.randint(xkey, (batch, seq), 0, vocab_size, dtype=jnp.int32)

    logits, h, c = network_forward(params, x)
    jax.block_until_ready((logits, h, c))

    assert logits.shape == (batch, vocab_size)
    assert h.shape == (1, batch, 8)
    assert c.shape == (1, batch, 8)

    # Second call with explicit (h, c) carry, as in the PyTorch forward.
    logits2, h2, c2 = network_forward(params, x, h, c)
    jax.block_until_ready((logits2, h2, c2))
    assert logits2.shape == (batch, vocab_size)

    print("KERNEL_OK")
</pallas_src>

<mosaic_0001>
module attributes {stable_mosaic.version = 11 : i64} {
  func.func @_network_kernel(%arg0: memref<16x2xf32, #tpu.memory_space<vmem>>, %arg1: memref<2x8xf32, #tpu.memory_space<vmem>>, %arg2: memref<2x8xf32, #tpu.memory_space<vmem>>, %arg3: memref<2x32xf32, #tpu.memory_space<vmem>>, %arg4: memref<8x32xf32, #tpu.memory_space<vmem>>, %arg5: memref<1x32xf32, #tpu.memory_space<vmem>>, %arg6: memref<8x128xf32, #tpu.memory_space<vmem>>, %arg7: memref<1x128xf32, #tpu.memory_space<vmem>>, %arg8: memref<2x128xf32, #tpu.memory_space<vmem>>, %arg9: memref<2x8xf32, #tpu.memory_space<vmem>>, %arg10: memref<2x8xf32, #tpu.memory_space<vmem>>) attributes {dimension_semantics = [], scalar_prefetch = 0 : i64, scratch_operands = 0 : i64, tpu.core_type = #tpu.core_type<tc>} {
    %c0 = arith.constant 0 : index
    %c0_0 = arith.constant 0 : index
    %0 = vector.load %arg0[%c0, %c0_0] : memref<16x2xf32, #tpu.memory_space<vmem>>, vector<16x2xf32>
    %c0_1 = arith.constant 0 : index
    %c0_2 = arith.constant 0 : index
    %1 = vector.load %arg3[%c0_1, %c0_2] : memref<2x32xf32, #tpu.memory_space<vmem>>, vector<2x32xf32>
    %cst = arith.constant dense<0.000000e+00> : vector<16x32xf32>
    %2 = tpu.matmul %0, %1, %cst {dimension_numbers = #tpu.dot_dimension_numbers<[1], [0], [0], [1], [0, 0, 1, 1], [], []>} : vector<16x2xf32>, vector<2x32xf32>, vector<16x32xf32> -> vector<16x32xf32>
    %c0_3 = arith.constant 0 : index
    %c0_4 = arith.constant 0 : index
    %3 = vector.load %arg5[%c0_3, %c0_4] : memref<1x32xf32, #tpu.memory_space<vmem>>, vector<1x32xf32>
    %4 = vector.broadcast %3 : vector<1x32xf32> to vector<16x32xf32>
    %5 = arith.addf %2, %4 : vector<16x32xf32>
    %c0_5 = arith.constant 0 : index
    %c0_6 = arith.constant 0 : index
    %6 = vector.load %arg4[%c0_5, %c0_6] : memref<8x32xf32, #tpu.memory_space<vmem>>, vector<8x32xf32>
    %7 = vector.extract_strided_slice %6 {offsets = [0, 0], sizes = [1, 32], strides = [1, 1]} : vector<8x32xf32> to vector<1x32xf32>
    %8 = vector.extract_strided_slice %6 {offsets = [1, 0], sizes = [1, 32], strides = [1, 1]} : vector<8x32xf32> to vector<1x32xf32>
    %9 = vector.extract_strided_slice %6 {offsets = [2, 0], sizes = [1, 32], strides = [1, 1]} : vector<8x32xf32> to vector<1x32xf32>
    %10 = vector.extract_strided_slice %6 {offsets = [3, 0], sizes = [1, 32], strides = [1, 1]} : vector<8x32xf32> to vector<1x32xf32>
    %11 = vector.extract_strided_slice %6 {offsets = [4, 0], sizes = [1, 32], strides = [1, 1]} : vector<8x32xf32> to vector<1x32xf32>
    %12 = vector.extract_strided_slice %6 {offsets = [5, 0], sizes = [1, 32], strides = [1, 1]} : vector<8x32xf32> to vector<1x32xf32>
    %13 = vector.extract_strided_slice %6 {offsets = [6, 0], sizes = [1, 32], strides = [1, 1]} : vector<8x32xf32> to vector<1x32xf32>
    %14 = vector.extract_strided_slice %6 {offsets = [7, 0], sizes = [1, 32], strides = [1, 1]} : vector<8x32xf32> to vector<1x32xf32>
    %c0_7 = arith.constant 0 : index
    %c0_8 = arith.constant 0 : index
    %15 = vector.load %arg1[%c0_7, %c0_8] : memref<2x8xf32, #tpu.memory_space<vmem>>, vector<2x8xf32>
    %c0_9 = arith.constant 0 : index
    %c0_10 = arith.constant 0 : index
    %16 = vector.load %arg2[%c0_9, %c0_10] : memref<2x8xf32, #tpu.memory_space<vmem>>, vector<2x8xf32>
    %17 = vector.extract_strided_slice %5 {offsets = [0, 0], sizes = [2, 32], strides = [1, 1]} : vector<16x32xf32> to vector<2x32xf32>
    %18 = vector.extract_strided_slice %15 {offsets = [0, 0], sizes = [2, 1], strides = [1, 1]} : vector<2x8xf32> to vector<2x1xf32>
    %19 = vector.broadcast %18 : vector<2x1xf32> to vector<2x32xf32>
    %20 = vector.broadcast %7 : vector<1x32xf32> to vector<2x32xf32>
    %21 = arith.mulf %19, %20 : vector<2x32xf32>
    %22 = vector.extract_strided_slice %15 {offsets = [0, 1], sizes = [2, 1], strides = [1, 1]} : vector<2x8xf32> to vector<2x1xf32>
    %23 = vector.broadcast %22 : vector<2x1xf32> to vector<2x32xf32>
    %24 = vector.broadcast %8 : vector<1x32xf32> to vector<2x32xf32>
    %25 = arith.mulf %23, %24 : vector<2x32xf32>
    %26 = vector.extract_strided_slice %15 {offsets = [0, 2], sizes = [2, 1], strides = [1, 1]} : vector<2x8xf32> to vector<2x1xf32>
    %27 = vector.broadcast %26 : vector<2x1xf32> to vector<2x32xf32>
    %28 = vector.broadcast %9 : vector<1x32xf32> to vector<2x32xf32>
    %29 = arith.mulf %27, %28 : vector<2x32xf32>
    %30 = vector.extract_strided_slice %15 {offsets = [0, 3], sizes = [2, 1], strides = [1, 1]} : vector<2x8xf32> to vector<2x1xf32>
    %31 = vector.broadcast %30 : vector<2x1xf32> to vector<2x32xf32>
    %32 = vector.broadcast %10 : vector<1x32xf32> to vector<2x32xf32>
    %33 = arith.mulf %31, %32 : vector<2x32xf32>
    %34 = vector.extract_strided_slice %15 {offsets = [0, 4], sizes = [2, 1], strides = [1, 1]} : vector<2x8xf32> to vector<2x1xf32>
    %35 = vector.broadcast %34 : vector<2x1xf32> to vector<2x32xf32>
    %36 = vector.broadcast %11 : vector<1x32xf32> to vector<2x32xf32>
    %37 = arith.mulf %35, %36 : vector<2x32xf32>
    %38 = vector.extract_strided_slice %15 {offsets = [0, 5], sizes = [2, 1], strides = [1, 1]} : vector<2x8xf32> to vector<2x1xf32>
    %39 = vector.broadcast %38 : vector<2x1xf32> to vector<2x32xf32>
    %40 = vector.broadcast %12 : vector<1x32xf32> to vector<2x32xf32>
    %41 = arith.mulf %39, %40 : vector<2x32xf32>
    %42 = vector.extract_strided_slice %15 {offsets = [0, 6], sizes = [2, 1], strides = [1, 1]} : vector<2x8xf32> to vector<2x1xf32>
    %43 = vector.broadcast %42 : vector<2x1xf32> to vector<2x32xf32>
    %44 = vector.broadcast %13 : vector<1x32xf32> to vector<2x32xf32>
    %45 = arith.mulf %43, %44 : vector<2x32xf32>
    %46 = vector.extract_strided_slice %15 {offsets = [0, 7], sizes = [2, 1], strides = [1, 1]} : vector<2x8xf32> to vector<2x1xf32>
    %47 = vector.broadcast %46 : vector<2x1xf32> to vector<2x32xf32>
    %48 = vector.broadcast %14 : vector<1x32xf32> to vector<2x32xf32>
    %49 = arith.mulf %47, %48 : vector<2x32xf32>
    %50 = arith.addf %21, %25 : vector<2x32xf32>
    %51 = arith.addf %29, %33 : vector<2x32xf32>
    %52 = arith.addf %37, %41 : vector<2x32xf32>
    %53 = arith.addf %45, %49 : vector<2x32xf32>
    %54 = arith.addf %50, %51 : vector<2x32xf32>
    %55 = arith.addf %52, %53 : vector<2x32xf32>
    %56 = arith.addf %54, %55 : vector<2x32xf32>
    %57 = arith.addf %17, %56 : vector<2x32xf32>
    %58 = vector.extract_strided_slice %57 {offsets = [0, 0], sizes = [2, 24], strides = [1, 1]} : vector<2x32xf32> to vector<2x24xf32>
    %59 = arith.negf %58 : vector<2x24xf32>
    %60 = math.exp %59 : vector<2x24xf32>
    %cst_11 = arith.constant 1.000000e+00 : f32
    %61 = vector.broadcast %cst_11 : f32 to vector<2x24xf32>
    %62 = arith.addf %61, %60 : vector<2x24xf32>
    %63 = arith.divf %61, %62 : vector<2x24xf32>
    %64 = vector.extract_strided_slice %57 {offsets = [0, 24], sizes = [2, 8], strides = [1, 1]} : vector<2x32xf32> to vector<2x8xf32>
    %65 = math.tanh %64 : vector<2x8xf32>
    %66 = vector.extract_strided_slice %63 {offsets = [0, 0], sizes = [2, 8], strides = [1, 1]} : vector<2x24xf32> to vector<2x8xf32>
    %67 = vector.extract_strided_slice %63 {offsets = [0, 8], sizes = [2, 8], strides = [1, 1]} : vector<2x24xf32> to vector<2x8xf32>
    %68 = vector.extract_strided_slice %63 {offsets = [0, 16], sizes = [2, 8], strides = [1, 1]} : vector<2x24xf32> to vector<2x8xf32>
    %69 = arith.mulf %67, %16 : vector<2x8xf32>
    %70 = arith.mulf %66, %65 : vector<2x8xf32>
    %71 = arith.addf %69, %70 : vector<2x8xf32>
    %72 = math.tanh %71 : vector<2x8xf32>
    %73 = arith.mulf %68, %72 : vector<2x8xf32>
    %74 = vector.extract_strided_slice %5 {offsets = [2, 0], sizes = [2, 32], strides = [1, 1]} : vector<16x32xf32> to vector<2x32xf32>
    %75 = vector.extract_strided_slice %73 {offsets = [0, 0], sizes = [2, 1], strides = [1, 1]} : vector<2x8xf32> to vector<2x1xf32>
    %76 = vector.broadcast %75 : vector<2x1xf32> to vector<2x32xf32>
    %77 = vector.broadcast %7 : vector<1x32xf32> to vector<2x32xf32>
    %78 = arith.mulf %76, %77 : vector<2x32xf32>
    %79 = vector.extract_strided_slice %73 {offsets = [0, 1], sizes = [2, 1], strides = [1, 1]} : vector<2x8xf32> to vector<2x1xf32>
    %80 = vector.broadcast %79 : vector<2x1xf32> to vector<2x32xf32>
    %81 = vector.broadcast %8 : vector<1x32xf32> to vector<2x32xf32>
    %82 = arith.mulf %80, %81 : vector<2x32xf32>
    %83 = vector.extract_strided_slice %73 {offsets = [0, 2], sizes = [2, 1], strides = [1, 1]} : vector<2x8xf32> to vector<2x1xf32>
    %84 = vector.broadcast %83 : vector<2x1xf32> to vector<2x32xf32>
    %85 = vector.broadcast %9 : vector<1x32xf32> to vector<2x32xf32>
    %86 = arith.mulf %84, %85 : vector<2x32xf32>
    %87 = vector.extract_strided_slice %73 {offsets = [0, 3], sizes = [2, 1], strides = [1, 1]} : vector<2x8xf32> to vector<2x1xf32>
    %88 = vector.broadcast %87 : vector<2x1xf32> to vector<2x32xf32>
    %89 = vector.broadcast %10 : vector<1x32xf32> to vector<2x32xf32>
    %90 = arith.mulf %88, %89 : vector<2x32xf32>
    %91 = vector.extract_strided_slice %73 {offsets = [0, 4], sizes = [2, 1], strides = [1, 1]} : vector<2x8xf32> to vector<2x1xf32>
    %92 = vector.broadcast %91 : vector<2x1xf32> to vector<2x32xf32>
    %93 = vector.broadcast %11 : vector<1x32xf32> to vector<2x32xf32>
    %94 = arith.mulf %92, %93 : vector<2x32xf32>
    %95 = vector.extract_strided_slice %73 {offsets = [0, 5], sizes = [2, 1], strides = [1, 1]} : vector<2x8xf32> to vector<2x1xf32>
    %96 = vector.broadcast %95 : vector<2x1xf32> to vector<2x32xf32>
    %97 = vector.broadcast %12 : vector<1x32xf32> to vector<2x32xf32>
    %98 = arith.mulf %96, %97 : vector<2x32xf32>
    %99 = vector.extract_strided_slice %73 {offsets = [0, 6], sizes = [2, 1], strides = [1, 1]} : vector<2x8xf32> to vector<2x1xf32>
    %100 = vector.broadcast %99 : vector<2x1xf32> to vector<2x32xf32>
    %101 = vector.broadcast %13 : vector<1x32xf32> to vector<2x32xf32>
    %102 = arith.mulf %100, %101 : vector<2x32xf32>
    %103 = vector.extract_strided_slice %73 {offsets = [0, 7], sizes = [2, 1], strides = [1, 1]} : vector<2x8xf32> to vector<2x1xf32>
    %104 = vector.broadcast %103 : vector<2x1xf32> to vector<2x32xf32>
    %105 = vector.broadcast %14 : vector<1x32xf32> to vector<2x32xf32>
    %106 = arith.mulf %104, %105 : vector<2x32xf32>
    %107 = arith.addf %78, %82 : vector<2x32xf32>
    %108 = arith.addf %86, %90 : vector<2x32xf32>
    %109 = arith.addf %94, %98 : vector<2x32xf32>
    %110 = arith.addf %102, %106 : vector<2x32xf32>
    %111 = arith.addf %107, %108 : vector<2x32xf32>
    %112 = arith.addf %109, %110 : vector<2x32xf32>
    %113 = arith.addf %111, %112 : vector<2x32xf32>
    %114 = arith.addf %74, %113 : vector<2x32xf32>
    %115 = vector.extract_strided_slice %114 {offsets = [0, 0], sizes = [2, 24], strides = [1, 1]} : vector<2x32xf32> to vector<2x24xf32>
    %116 = arith.negf %115 : vector<2x24xf32>
    %117 = math.exp %116 : vector<2x24xf32>
    %cst_12 = arith.constant 1.000000e+00 : f32
    %118 = vector.broadcast %cst_12 : f32 to vector<2x24xf32>
    %119 = arith.addf %118, %117 : vector<2x24xf32>
    %120 = arith.divf %118, %119 : vector<2x24xf32>
    %121 = vector.extract_strided_slice %114 {offsets = [0, 24], sizes = [2, 8], strides = [1, 1]} : vector<2x32xf32> to vector<2x8xf32>
    %122 = math.tanh %121 : vector<2x8xf32>
    %123 = vector.extract_strided_slice %120 {offsets = [0, 0], sizes = [2, 8], strides = [1, 1]} : vector<2x24xf32> to vector<2x8xf32>
    %124 = vector.extract_strided_slice %120 {offsets = [0, 8], sizes = [2, 8], strides = [1, 1]} : vector<2x24xf32> to vector<2x8xf32>
    %125 = vector.extract_strided_slice %120 {offsets = [0, 16], sizes = [2, 8], strides = [1, 1]} : vector<2x24xf32> to vector<2x8xf32>
    %126 = arith.mulf %124, %71 : vector<2x8xf32>
    %127 = arith.mulf %123, %122 : vector<2x8xf32>
    %128 = arith.addf %126, %127 : vector<2x8xf32>
    %129 = math.tanh %128 : vector<2x8xf32>
    %130 = arith.mulf %125, %129 : vector<2x8xf32>
    %131 = vector.extract_strided_slice %5 {offsets = [4, 0], sizes = [2, 32], strides = [1, 1]} : vector<16x32xf32> to vector<2x32xf32>
    %132 = vector.extract_strided_slice %130 {offsets = [0, 0], sizes = [2, 1], strides = [1, 1]} : vector<2x8xf32> to vector<2x1xf32>
    %133 = vector.broadcast %132 : vector<2x1xf32> to vector<2x32xf32>
    %134 = vector.broadcast %7 : vector<1x32xf32> to vector<2x32xf32>
    %135 = arith.mulf %133, %134 : vector<2x32xf32>
    %136 = vector.extract_strided_slice %130 {offsets = [0, 1], sizes = [2, 1], strides = [1, 1]} : vector<2x8xf32> to vector<2x1xf32>
    %137 = vector.broadcast %136 : vector<2x1xf32> to vector<2x32xf32>
    %138 = vector.broadcast %8 : vector<1x32xf32> to vector<2x32xf32>
    %139 = arith.mulf %137, %138 : vector<2x32xf32>
    %140 = vector.extract_strided_slice %130 {offsets = [0, 2], sizes = [2, 1], strides = [1, 1]} : vector<2x8xf32> to vector<2x1xf32>
    %141 = vector.broadcast %140 : vector<2x1xf32> to vector<2x32xf32>
    %142 = vector.broadcast %9 : vector<1x32xf32> to vector<2x32xf32>
    %143 = arith.mulf %141, %142 : vector<2x32xf32>
    %144 = vector.extract_strided_slice %130 {offsets = [0, 3], sizes = [2, 1], strides = [1, 1]} : vector<2x8xf32> to vector<2x1xf32>
    %145 = vector.broadcast %144 : vector<2x1xf32> to vector<2x32xf32>
    %146 = vector.broadcast %10 : vector<1x32xf32> to vector<2x32xf32>
    %147 = arith.mulf %145, %146 : vector<2x32xf32>
    %148 = vector.extract_strided_slice %130 {offsets = [0, 4], sizes = [2, 1], strides = [1, 1]} : vector<2x8xf32> to vector<2x1xf32>
    %149 = vector.broadcast %148 : vector<2x1xf32> to vector<2x32xf32>
    %150 = vector.broadcast %11 : vector<1x32xf32> to vector<2x32xf32>
    %151 = arith.mulf %149, %150 : vector<2x32xf32>
    %152 = vector.extract_strided_slice %130 {offsets = [0, 5], sizes = [2, 1], strides = [1, 1]} : vector<2x8xf32> to vector<2x1xf32>
    %153 = vector.broadcast %152 : vector<2x1xf32> to vector<2x32xf32>
    %154 = vector.broadcast %12 : vector<1x32xf32> to vector<2x32xf32>
    %155 = arith.mulf %153, %154 : vector<2x32xf32>
    %156 = vector.extract_strided_slice %130 {offsets = [0, 6], sizes = [2, 1], strides = [1, 1]} : vector<2x8xf32> to vector<2x1xf32>
    %157 = vector.broadcast %156 : vector<2x1xf32> to vector<2x32xf32>
    %158 = vector.broadcast %13 : vector<1x32xf32> to vector<2x32xf32>
    %159 = arith.mulf %157, %158 : vector<2x32xf32>
    %160 = vector.extract_strided_slice %130 {offsets = [0, 7], sizes = [2, 1], strides = [1, 1]} : vector<2x8xf32> to vector<2x1xf32>
    %161 = vector.broadcast %160 : vector<2x1xf32> to vector<2x32xf32>
    %162 = vector.broadcast %14 : vector<1x32xf32> to vector<2x32xf32>
    %163 = arith.mulf %161, %162 : vector<2x32xf32>
    %164 = arith.addf %135, %139 : vector<2x32xf32>
    %165 = arith.addf %143, %147 : vector<2x32xf32>
    %166 = arith.addf %151, %155 : vector<2x32xf32>
    %167 = arith.addf %159, %163 : vector<2x32xf32>
    %168 = arith.addf %164, %165 : vector<2x32xf32>
    %169 = arith.addf %166, %167 : vector<2x32xf32>
    %170 = arith.addf %168, %169 : vector<2x32xf32>
    %171 = arith.addf %131, %170 : vector<2x32xf32>
    %172 = vector.extract_strided_slice %171 {offsets = [0, 0], sizes = [2, 24], strides = [1, 1]} : vector<2x32xf32> to vector<2x24xf32>
    %173 = arith.negf %172 : vector<2x24xf32>
    %174 = math.exp %173 : vector<2x24xf32>
    %cst_13 = arith.constant 1.000000e+00 : f32
    %175 = vector.broadcast %cst_13 : f32 to vector<2x24xf32>
    %176 = arith.addf %175, %174 : vector<2x24xf32>
    %177 = arith.divf %175, %176 : vector<2x24xf32>
    %178 = vector.extract_strided_slice %171 {offsets = [0, 24], sizes = [2, 8], strides = [1, 1]} : vector<2x32xf32> to vector<2x8xf32>
    %179 = math.tanh %178 : vector<2x8xf32>
    %180 = vector.extract_strided_slice %177 {offsets = [0, 0], sizes = [2, 8], strides = [1, 1]} : vector<2x24xf32> to vector<2x8xf32>
    %181 = vector.extract_strided_slice %177 {offsets = [0, 8], sizes = [2, 8], strides = [1, 1]} : vector<2x24xf32> to vector<2x8xf32>
    %182 = vector.extract_strided_slice %177 {offsets = [0, 16], sizes = [2, 8], strides = [1, 1]} : vector<2x24xf32> to vector<2x8xf32>
    %183 = arith.mulf %181, %128 : vector<2x8xf32>
    %184 = arith.mulf %180, %179 : vector<2x8xf32>
    %185 = arith.addf %183, %184 : vector<2x8xf32>
    %186 = math.tanh %185 : vector<2x8xf32>
    %187 = arith.mulf %182, %186 : vector<2x8xf32>
    %188 = vector.extract_strided_slice %5 {offsets = [6, 0], sizes = [2, 32], strides = [1, 1]} : vector<16x32xf32> to vector<2x32xf32>
    %189 = vector.extract_strided_slice %187 {offsets = [0, 0], sizes = [2, 1], strides = [1, 1]} : vector<2x8xf32> to vector<2x1xf32>
    %190 = vector.broadcast %189 : vector<2x1xf32> to vector<2x32xf32>
    %191 = vector.broadcast %7 : vector<1x32xf32> to vector<2x32xf32>
    %192 = arith.mulf %190, %191 : vector<2x32xf32>
    %193 = vector.extract_strided_slice %187 {offsets = [0, 1], sizes = [2, 1], strides = [1, 1]} : vector<2x8xf32> to vector<2x1xf32>
    %194 = vector.broadcast %193 : vector<2x1xf32> to vector<2x32xf32>
    %195 = vector.broadcast %8 : vector<1x32xf32> to vector<2x32xf32>
    %196 = arith.mulf %194, %195 : vector<2x32xf32>
    %197 = vector.extract_strided_slice %187 {offsets = [0, 2], sizes = [2, 1], strides = [1, 1]} : vector<2x8xf32> to vector<2x1xf32>
    %198 = vector.broadcast %197 : vector<2x1xf32> to vector<2x32xf32>
    %199 = vector.broadcast %9 : vector<1x32xf32> to vector<2x32xf32>
    %200 = arith.mulf %198, %199 : vector<2x32xf32>
    %201 = vector.extract_strided_slice %187 {offsets = [0, 3], sizes = [2, 1], strides = [1, 1]} : vector<2x8xf32> to vector<2x1xf32>
    %202 = vector.broadcast %201 : vector<2x1xf32> to vector<2x32xf32>
    %203 = vector.broadcast %10 : vector<1x32xf32> to vector<2x32xf32>
    %204 = arith.mulf %202, %203 : vector<2x32xf32>
    %205 = vector.extract_strided_slice %187 {offsets = [0, 4], sizes = [2, 1], strides = [1, 1]} : vector<2x8xf32> to vector<2x1xf32>
    %206 = vector.broadcast %205 : vector<2x1xf32> to vector<2x32xf32>
    %207 = vector.broadcast %11 : vector<1x32xf32> to vector<2x32xf32>
    %208 = arith.mulf %206, %207 : vector<2x32xf32>
    %209 = vector.extract_strided_slice %187 {offsets = [0, 5], sizes = [2, 1], strides = [1, 1]} : vector<2x8xf32> to vector<2x1xf32>
    %210 = vector.broadcast %209 : vector<2x1xf32> to vector<2x32xf32>
    %211 = vector.broadcast %12 : vector<1x32xf32> to vector<2x32xf32>
    %212 = arith.mulf %210, %211 : vector<2x32xf32>
    %213 = vector.extract_strided_slice %187 {offsets = [0, 6], sizes = [2, 1], strides = [1, 1]} : vector<2x8xf32> to vector<2x1xf32>
    %214 = vector.broadcast %213 : vector<2x1xf32> to vector<2x32xf32>
    %215 = vector.broadcast %13 : vector<1x32xf32> to vector<2x32xf32>
    %216 = arith.mulf %214, %215 : vector<2x32xf32>
    %217 = vector.extract_strided_slice %187 {offsets = [0, 7], sizes = [2, 1], strides = [1, 1]} : vector<2x8xf32> to vector<2x1xf32>
    %218 = vector.broadcast %217 : vector<2x1xf32> to vector<2x32xf32>
    %219 = vector.broadcast %14 : vector<1x32xf32> to vector<2x32xf32>
    %220 = arith.mulf %218, %219 : vector<2x32xf32>
    %221 = arith.addf %192, %196 : vector<2x32xf32>
    %222 = arith.addf %200, %204 : vector<2x32xf32>
    %223 = arith.addf %208, %212 : vector<2x32xf32>
    %224 = arith.addf %216, %220 : vector<2x32xf32>
    %225 = arith.addf %221, %222 : vector<2x32xf32>
    %226 = arith.addf %223, %224 : vector<2x32xf32>
    %227 = arith.addf %225, %226 : vector<2x32xf32>
    %228 = arith.addf %188, %227 : vector<2x32xf32>
    %229 = vector.extract_strided_slice %228 {offsets = [0, 0], sizes = [2, 24], strides = [1, 1]} : vector<2x32xf32> to vector<2x24xf32>
    %230 = arith.negf %229 : vector<2x24xf32>
    %231 = math.exp %230 : vector<2x24xf32>
    %cst_14 = arith.constant 1.000000e+00 : f32
    %232 = vector.broadcast %cst_14 : f32 to vector<2x24xf32>
    %233 = arith.addf %232, %231 : vector<2x24xf32>
    %234 = arith.divf %232, %233 : vector<2x24xf32>
    %235 = vector.extract_strided_slice %228 {offsets = [0, 24], sizes = [2, 8], strides = [1, 1]} : vector<2x32xf32> to vector<2x8xf32>
    %236 = math.tanh %235 : vector<2x8xf32>
    %237 = vector.extract_strided_slice %234 {offsets = [0, 0], sizes = [2, 8], strides = [1, 1]} : vector<2x24xf32> to vector<2x8xf32>
    %238 = vector.extract_strided_slice %234 {offsets = [0, 8], sizes = [2, 8], strides = [1, 1]} : vector<2x24xf32> to vector<2x8xf32>
    %239 = vector.extract_strided_slice %234 {offsets = [0, 16], sizes = [2, 8], strides = [1, 1]} : vector<2x24xf32> to vector<2x8xf32>
    %240 = arith.mulf %238, %185 : vector<2x8xf32>
    %241 = arith.mulf %237, %236 : vector<2x8xf32>
    %242 = arith.addf %240, %241 : vector<2x8xf32>
    %243 = math.tanh %242 : vector<2x8xf32>
    %244 = arith.mulf %239, %243 : vector<2x8xf32>
    %245 = vector.extract_strided_slice %5 {offsets = [8, 0], sizes = [2, 32], strides = [1, 1]} : vector<16x32xf32> to vector<2x32xf32>
    %246 = vector.extract_strided_slice %244 {offsets = [0, 0], sizes = [2, 1], strides = [1, 1]} : vector<2x8xf32> to vector<2x1xf32>
    %247 = vector.broadcast %246 : vector<2x1xf32> to vector<2x32xf32>
    %248 = vector.broadcast %7 : vector<1x32xf32> to vector<2x32xf32>
    %249 = arith.mulf %247, %248 : vector<2x32xf32>
    %250 = vector.extract_strided_slice %244 {offsets = [0, 1], sizes = [2, 1], strides = [1, 1]} : vector<2x8xf32> to vector<2x1xf32>
    %251 = vector.broadcast %250 : vector<2x1xf32> to vector<2x32xf32>
    %252 = vector.broadcast %8 : vector<1x32xf32> to vector<2x32xf32>
    %253 = arith.mulf %251, %252 : vector<2x32xf32>
    %254 = vector.extract_strided_slice %244 {offsets = [0, 2], sizes = [2, 1], strides = [1, 1]} : vector<2x8xf32> to vector<2x1xf32>
    %255 = vector.broadcast %254 : vector<2x1xf32> to vector<2x32xf32>
    %256 = vector.broadcast %9 : vector<1x32xf32> to vector<2x32xf32>
    %257 = arith.mulf %255, %256 : vector<2x32xf32>
    %258 = vector.extract_strided_slice %244 {offsets = [0, 3], sizes = [2, 1], strides = [1, 1]} : vector<2x8xf32> to vector<2x1xf32>
    %259 = vector.broadcast %258 : vector<2x1xf32> to vector<2x32xf32>
    %260 = vector.broadcast %10 : vector<1x32xf32> to vector<2x32xf32>
    %261 = arith.mulf %259, %260 : vector<2x32xf32>
    %262 = vector.extract_strided_slice %244 {offsets = [0, 4], sizes = [2, 1], strides = [1, 1]} : vector<2x8xf32> to vector<2x1xf32>
    %263 = vector.broadcast %262 : vector<2x1xf32> to vector<2x32xf32>
    %264 = vector.broadcast %11 : vector<1x32xf32> to vector<2x32xf32>
    %265 = arith.mulf %263, %264 : vector<2x32xf32>
    %266 = vector.extract_strided_slice %244 {offsets = [0, 5], sizes = [2, 1], strides = [1, 1]} : vector<2x8xf32> to vector<2x1xf32>
    %267 = vector.broadcast %266 : vector<2x1xf32> to vector<2x32xf32>
    %268 = vector.broadcast %12 : vector<1x32xf32> to vector<2x32xf32>
    %269 = arith.mulf %267, %268 : vector<2x32xf32>
    %270 = vector.extract_strided_slice %244 {offsets = [0, 6], sizes = [2, 1], strides = [1, 1]} : vector<2x8xf32> to vector<2x1xf32>
    %271 = vector.broadcast %270 : vector<2x1xf32> to vector<2x32xf32>
    %272 = vector.broadcast %13 : vector<1x32xf32> to vector<2x32xf32>
    %273 = arith.mulf %271, %272 : vector<2x32xf32>
    %274 = vector.extract_strided_slice %244 {offsets = [0, 7], sizes = [2, 1], strides = [1, 1]} : vector<2x8xf32> to vector<2x1xf32>
    %275 = vector.broadcast %274 : vector<2x1xf32> to vector<2x32xf32>
    %276 = vector.broadcast %14 : vector<1x32xf32> to vector<2x32xf32>
    %277 = arith.mulf %275, %276 : vector<2x32xf32>
    %278 = arith.addf %249, %253 : vector<2x32xf32>
    %279 = arith.addf %257, %261 : vector<2x32xf32>
    %280 = arith.addf %265, %269 : vector<2x32xf32>
    %281 = arith.addf %273, %277 : vector<2x32xf32>
    %282 = arith.addf %278, %279 : vector<2x32xf32>
    %283 = arith.addf %280, %281 : vector<2x32xf32>
    %284 = arith.addf %282, %283 : vector<2x32xf32>
    %285 = arith.addf %245, %284 : vector<2x32xf32>
    %286 = vector.extract_strided_slice %285 {offsets = [0, 0], sizes = [2, 24], strides = [1, 1]} : vector<2x32xf32> to vector<2x24xf32>
    %287 = arith.negf %286 : vector<2x24xf32>
    %288 = math.exp %287 : vector<2x24xf32>
    %cst_15 = arith.constant 1.000000e+00 : f32
    %289 = vector.broadcast %cst_15 : f32 to vector<2x24xf32>
    %290 = arith.addf %289, %288 : vector<2x24xf32>
    %291 = arith.divf %289, %290 : vector<2x24xf32>
    %292 = vector.extract_strided_slice %285 {offsets = [0, 24], sizes = [2, 8], strides = [1, 1]} : vector<2x32xf32> to vector<2x8xf32>
    %293 = math.tanh %292 : vector<2x8xf32>
    %294 = vector.extract_strided_slice %291 {offsets = [0, 0], sizes = [2, 8], strides = [1, 1]} : vector<2x24xf32> to vector<2x8xf32>
    %295 = vector.extract_strided_slice %291 {offsets = [0, 8], sizes = [2, 8], strides = [1, 1]} : vector<2x24xf32> to vector<2x8xf32>
    %296 = vector.extract_strided_slice %291 {offsets = [0, 16], sizes = [2, 8], strides = [1, 1]} : vector<2x24xf32> to vector<2x8xf32>
    %297 = arith.mulf %295, %242 : vector<2x8xf32>
    %298 = arith.mulf %294, %293 : vector<2x8xf32>
    %299 = arith.addf %297, %298 : vector<2x8xf32>
    %300 = math.tanh %299 : vector<2x8xf32>
    %301 = arith.mulf %296, %300 : vector<2x8xf32>
    %302 = vector.extract_strided_slice %5 {offsets = [10, 0], sizes = [2, 32], strides = [1, 1]} : vector<16x32xf32> to vector<2x32xf32>
    %303 = vector.extract_strided_slice %301 {offsets = [0, 0], sizes = [2, 1], strides = [1, 1]} : vector<2x8xf32> to vector<2x1xf32>
    %304 = vector.broadcast %303 : vector<2x1xf32> to vector<2x32xf32>
    %305 = vector.broadcast %7 : vector<1x32xf32> to vector<2x32xf32>
    %306 = arith.mulf %304, %305 : vector<2x32xf32>
    %307 = vector.extract_strided_slice %301 {offsets = [0, 1], sizes = [2, 1], strides = [1, 1]} : vector<2x8xf32> to vector<2x1xf32>
    %308 = vector.broadcast %307 : vector<2x1xf32> to vector<2x32xf32>
    %309 = vector.broadcast %8 : vector<1x32xf32> to vector<2x32xf32>
    %310 = arith.mulf %308, %309 : vector<2x32xf32>
    %311 = vector.extract_strided_slice %301 {offsets = [0, 2], sizes = [2, 1], strides = [1, 1]} : vector<2x8xf32> to vector<2x1xf32>
    %312 = vector.broadcast %311 : vector<2x1xf32> to vector<2x32xf32>
    %313 = vector.broadcast %9 : vector<1x32xf32> to vector<2x32xf32>
    %314 = arith.mulf %312, %313 : vector<2x32xf32>
    %315 = vector.extract_strided_slice %301 {offsets = [0, 3], sizes = [2, 1], strides = [1, 1]} : vector<2x8xf32> to vector<2x1xf32>
    %316 = vector.broadcast %315 : vector<2x1xf32> to vector<2x32xf32>
    %317 = vector.broadcast %10 : vector<1x32xf32> to vector<2x32xf32>
    %318 = arith.mulf %316, %317 : vector<2x32xf32>
    %319 = vector.extract_strided_slice %301 {offsets = [0, 4], sizes = [2, 1], strides = [1, 1]} : vector<2x8xf32> to vector<2x1xf32>
    %320 = vector.broadcast %319 : vector<2x1xf32> to vector<2x32xf32>
    %321 = vector.broadcast %11 : vector<1x32xf32> to vector<2x32xf32>
    %322 = arith.mulf %320, %321 : vector<2x32xf32>
    %323 = vector.extract_strided_slice %301 {offsets = [0, 5], sizes = [2, 1], strides = [1, 1]} : vector<2x8xf32> to vector<2x1xf32>
    %324 = vector.broadcast %323 : vector<2x1xf32> to vector<2x32xf32>
    %325 = vector.broadcast %12 : vector<1x32xf32> to vector<2x32xf32>
    %326 = arith.mulf %324, %325 : vector<2x32xf32>
    %327 = vector.extract_strided_slice %301 {offsets = [0, 6], sizes = [2, 1], strides = [1, 1]} : vector<2x8xf32> to vector<2x1xf32>
    %328 = vector.broadcast %327 : vector<2x1xf32> to vector<2x32xf32>
    %329 = vector.broadcast %13 : vector<1x32xf32> to vector<2x32xf32>
    %330 = arith.mulf %328, %329 : vector<2x32xf32>
    %331 = vector.extract_strided_slice %301 {offsets = [0, 7], sizes = [2, 1], strides = [1, 1]} : vector<2x8xf32> to vector<2x1xf32>
    %332 = vector.broadcast %331 : vector<2x1xf32> to vector<2x32xf32>
    %333 = vector.broadcast %14 : vector<1x32xf32> to vector<2x32xf32>
    %334 = arith.mulf %332, %333 : vector<2x32xf32>
    %335 = arith.addf %306, %310 : vector<2x32xf32>
    %336 = arith.addf %314, %318 : vector<2x32xf32>
    %337 = arith.addf %322, %326 : vector<2x32xf32>
    %338 = arith.addf %330, %334 : vector<2x32xf32>
    %339 = arith.addf %335, %336 : vector<2x32xf32>
    %340 = arith.addf %337, %338 : vector<2x32xf32>
    %341 = arith.addf %339, %340 : vector<2x32xf32>
    %342 = arith.addf %302, %341 : vector<2x32xf32>
    %343 = vector.extract_strided_slice %342 {offsets = [0, 0], sizes = [2, 24], strides = [1, 1]} : vector<2x32xf32> to vector<2x24xf32>
    %344 = arith.negf %343 : vector<2x24xf32>
    %345 = math.exp %344 : vector<2x24xf32>
    %cst_16 = arith.constant 1.000000e+00 : f32
    %346 = vector.broadcast %cst_16 : f32 to vector<2x24xf32>
    %347 = arith.addf %346, %345 : vector<2x24xf32>
    %348 = arith.divf %346, %347 : vector<2x24xf32>
    %349 = vector.extract_strided_slice %342 {offsets = [0, 24], sizes = [2, 8], strides = [1, 1]} : vector<2x32xf32> to vector<2x8xf32>
    %350 = math.tanh %349 : vector<2x8xf32>
    %351 = vector.extract_strided_slice %348 {offsets = [0, 0], sizes = [2, 8], strides = [1, 1]} : vector<2x24xf32> to vector<2x8xf32>
    %352 = vector.extract_strided_slice %348 {offsets = [0, 8], sizes = [2, 8], strides = [1, 1]} : vector<2x24xf32> to vector<2x8xf32>
    %353 = vector.extract_strided_slice %348 {offsets = [0, 16], sizes = [2, 8], strides = [1, 1]} : vector<2x24xf32> to vector<2x8xf32>
    %354 = arith.mulf %352, %299 : vector<2x8xf32>
    %355 = arith.mulf %351, %350 : vector<2x8xf32>
    %356 = arith.addf %354, %355 : vector<2x8xf32>
    %357 = math.tanh %356 : vector<2x8xf32>
    %358 = arith.mulf %353, %357 : vector<2x8xf32>
    %359 = vector.extract_strided_slice %5 {offsets = [12, 0], sizes = [2, 32], strides = [1, 1]} : vector<16x32xf32> to vector<2x32xf32>
    %360 = vector.extract_strided_slice %358 {offsets = [0, 0], sizes = [2, 1], strides = [1, 1]} : vector<2x8xf32> to vector<2x1xf32>
    %361 = vector.broadcast %360 : vector<2x1xf32> to vector<2x32xf32>
    %362 = vector.broadcast %7 : vector<1x32xf32> to vector<2x32xf32>
    %363 = arith.mulf %361, %362 : vector<2x32xf32>
    %364 = vector.extract_strided_slice %358 {offsets = [0, 1], sizes = [2, 1], strides = [1, 1]} : vector<2x8xf32> to vector<2x1xf32>
    %365 = vector.broadcast %364 : vector<2x1xf32> to vector<2x32xf32>
    %366 = vector.broadcast %8 : vector<1x32xf32> to vector<2x32xf32>
    %367 = arith.mulf %365, %366 : vector<2x32xf32>
    %368 = vector.extract_strided_slice %358 {offsets = [0, 2], sizes = [2, 1], strides = [1, 1]} : vector<2x8xf32> to vector<2x1xf32>
    %369 = vector.broadcast %368 : vector<2x1xf32> to vector<2x32xf32>
    %370 = vector.broadcast %9 : vector<1x32xf32> to vector<2x32xf32>
    %371 = arith.mulf %369, %370 : vector<2x32xf32>
    %372 = vector.extract_strided_slice %358 {offsets = [0, 3], sizes = [2, 1], strides = [1, 1]} : vector<2x8xf32> to vector<2x1xf32>
    %373 = vector.broadcast %372 : vector<2x1xf32> to vector<2x32xf32>
    %374 = vector.broadcast %10 : vector<1x32xf32> to vector<2x32xf32>
    %375 = arith.mulf %373, %374 : vector<2x32xf32>
    %376 = vector.extract_strided_slice %358 {offsets = [0, 4], sizes = [2, 1], strides = [1, 1]} : vector<2x8xf32> to vector<2x1xf32>
    %377 = vector.broadcast %376 : vector<2x1xf32> to vector<2x32xf32>
    %378 = vector.broadcast %11 : vector<1x32xf32> to vector<2x32xf32>
    %379 = arith.mulf %377, %378 : vector<2x32xf32>
    %380 = vector.extract_strided_slice %358 {offsets = [0, 5], sizes = [2, 1], strides = [1, 1]} : vector<2x8xf32> to vector<2x1xf32>
    %381 = vector.broadcast %380 : vector<2x1xf32> to vector<2x32xf32>
    %382 = vector.broadcast %12 : vector<1x32xf32> to vector<2x32xf32>
    %383 = arith.mulf %381, %382 : vector<2x32xf32>
    %384 = vector.extract_strided_slice %358 {offsets = [0, 6], sizes = [2, 1], strides = [1, 1]} : vector<2x8xf32> to vector<2x1xf32>
    %385 = vector.broadcast %384 : vector<2x1xf32> to vector<2x32xf32>
    %386 = vector.broadcast %13 : vector<1x32xf32> to vector<2x32xf32>
    %387 = arith.mulf %385, %386 : vector<2x32xf32>
    %388 = vector.extract_strided_slice %358 {offsets = [0, 7], sizes = [2, 1], strides = [1, 1]} : vector<2x8xf32> to vector<2x1xf32>
    %389 = vector.broadcast %388 : vector<2x1xf32> to vector<2x32xf32>
    %390 = vector.broadcast %14 : vector<1x32xf32> to vector<2x32xf32>
    %391 = arith.mulf %389, %390 : vector<2x32xf32>
    %392 = arith.addf %363, %367 : vector<2x32xf32>
    %393 = arith.addf %371, %375 : vector<2x32xf32>
    %394 = arith.addf %379, %383 : vector<2x32xf32>
    %395 = arith.addf %387, %391 : vector<2x32xf32>
    %396 = arith.addf %392, %393 : vector<2x32xf32>
    %397 = arith.addf %394, %395 : vector<2x32xf32>
    %398 = arith.addf %396, %397 : vector<2x32xf32>
    %399 = arith.addf %359, %398 : vector<2x32xf32>
    %400 = vector.extract_strided_slice %399 {offsets = [0, 0], sizes = [2, 24], strides = [1, 1]} : vector<2x32xf32> to vector<2x24xf32>
    %401 = arith.negf %400 : vector<2x24xf32>
    %402 = math.exp %401 : vector<2x24xf32>
    %cst_17 = arith.constant 1.000000e+00 : f32
    %403 = vector.broadcast %cst_17 : f32 to vector<2x24xf32>
    %404 = arith.addf %403, %402 : vector<2x24xf32>
    %405 = arith.divf %403, %404 : vector<2x24xf32>
    %406 = vector.extract_strided_slice %399 {offsets = [0, 24], sizes = [2, 8], strides = [1, 1]} : vector<2x32xf32> to vector<2x8xf32>
    %407 = math.tanh %406 : vector<2x8xf32>
    %408 = vector.extract_strided_slice %405 {offsets = [0, 0], sizes = [2, 8], strides = [1, 1]} : vector<2x24xf32> to vector<2x8xf32>
    %409 = vector.extract_strided_slice %405 {offsets = [0, 8], sizes = [2, 8], strides = [1, 1]} : vector<2x24xf32> to vector<2x8xf32>
    %410 = vector.extract_strided_slice %405 {offsets = [0, 16], sizes = [2, 8], strides = [1, 1]} : vector<2x24xf32> to vector<2x8xf32>
    %411 = arith.mulf %409, %356 : vector<2x8xf32>
    %412 = arith.mulf %408, %407 : vector<2x8xf32>
    %413 = arith.addf %411, %412 : vector<2x8xf32>
    %414 = math.tanh %413 : vector<2x8xf32>
    %415 = arith.mulf %410, %414 : vector<2x8xf32>
    %416 = vector.extract_strided_slice %5 {offsets = [14, 0], sizes = [2, 32], strides = [1, 1]} : vector<16x32xf32> to vector<2x32xf32>
    %417 = vector.extract_strided_slice %415 {offsets = [0, 0], sizes = [2, 1], strides = [1, 1]} : vector<2x8xf32> to vector<2x1xf32>
    %418 = vector.broadcast %417 : vector<2x1xf32> to vector<2x32xf32>
    %419 = vector.broadcast %7 : vector<1x32xf32> to vector<2x32xf32>
    %420 = arith.mulf %418, %419 : vector<2x32xf32>
    %421 = vector.extract_strided_slice %415 {offsets = [0, 1], sizes = [2, 1], strides = [1, 1]} : vector<2x8xf32> to vector<2x1xf32>
    %422 = vector.broadcast %421 : vector<2x1xf32> to vector<2x32xf32>
    %423 = vector.broadcast %8 : vector<1x32xf32> to vector<2x32xf32>
    %424 = arith.mulf %422, %423 : vector<2x32xf32>
    %425 = vector.extract_strided_slice %415 {offsets = [0, 2], sizes = [2, 1], strides = [1, 1]} : vector<2x8xf32> to vector<2x1xf32>
    %426 = vector.broadcast %425 : vector<2x1xf32> to vector<2x32xf32>
    %427 = vector.broadcast %9 : vector<1x32xf32> to vector<2x32xf32>
    %428 = arith.mulf %426, %427 : vector<2x32xf32>
    %429 = vector.extract_strided_slice %415 {offsets = [0, 3], sizes = [2, 1], strides = [1, 1]} : vector<2x8xf32> to vector<2x1xf32>
    %430 = vector.broadcast %429 : vector<2x1xf32> to vector<2x32xf32>
    %431 = vector.broadcast %10 : vector<1x32xf32> to vector<2x32xf32>
    %432 = arith.mulf %430, %431 : vector<2x32xf32>
    %433 = vector.extract_strided_slice %415 {offsets = [0, 4], sizes = [2, 1], strides = [1, 1]} : vector<2x8xf32> to vector<2x1xf32>
    %434 = vector.broadcast %433 : vector<2x1xf32> to vector<2x32xf32>
    %435 = vector.broadcast %11 : vector<1x32xf32> to vector<2x32xf32>
    %436 = arith.mulf %434, %435 : vector<2x32xf32>
    %437 = vector.extract_strided_slice %415 {offsets = [0, 5], sizes = [2, 1], strides = [1, 1]} : vector<2x8xf32> to vector<2x1xf32>
    %438 = vector.broadcast %437 : vector<2x1xf32> to vector<2x32xf32>
    %439 = vector.broadcast %12 : vector<1x32xf32> to vector<2x32xf32>
    %440 = arith.mulf %438, %439 : vector<2x32xf32>
    %441 = vector.extract_strided_slice %415 {offsets = [0, 6], sizes = [2, 1], strides = [1, 1]} : vector<2x8xf32> to vector<2x1xf32>
    %442 = vector.broadcast %441 : vector<2x1xf32> to vector<2x32xf32>
    %443 = vector.broadcast %13 : vector<1x32xf32> to vector<2x32xf32>
    %444 = arith.mulf %442, %443 : vector<2x32xf32>
    %445 = vector.extract_strided_slice %415 {offsets = [0, 7], sizes = [2, 1], strides = [1, 1]} : vector<2x8xf32> to vector<2x1xf32>
    %446 = vector.broadcast %445 : vector<2x1xf32> to vector<2x32xf32>
    %447 = vector.broadcast %14 : vector<1x32xf32> to vector<2x32xf32>
    %448 = arith.mulf %446, %447 : vector<2x32xf32>
    %449 = arith.addf %420, %424 : vector<2x32xf32>
    %450 = arith.addf %428, %432 : vector<2x32xf32>
    %451 = arith.addf %436, %440 : vector<2x32xf32>
    %452 = arith.addf %444, %448 : vector<2x32xf32>
    %453 = arith.addf %449, %450 : vector<2x32xf32>
    %454 = arith.addf %451, %452 : vector<2x32xf32>
    %455 = arith.addf %453, %454 : vector<2x32xf32>
    %456 = arith.addf %416, %455 : vector<2x32xf32>
    %457 = vector.extract_strided_slice %456 {offsets = [0, 0], sizes = [2, 24], strides = [1, 1]} : vector<2x32xf32> to vector<2x24xf32>
    %458 = arith.negf %457 : vector<2x24xf32>
    %459 = math.exp %458 : vector<2x24xf32>
    %cst_18 = arith.constant 1.000000e+00 : f32
    %460 = vector.broadcast %cst_18 : f32 to vector<2x24xf32>
    %461 = arith.addf %460, %459 : vector<2x24xf32>
    %462 = arith.divf %460, %461 : vector<2x24xf32>
    %463 = vector.extract_strided_slice %456 {offsets = [0, 24], sizes = [2, 8], strides = [1, 1]} : vector<2x32xf32> to vector<2x8xf32>
    %464 = math.tanh %463 : vector<2x8xf32>
    %465 = vector.extract_strided_slice %462 {offsets = [0, 0], sizes = [2, 8], strides = [1, 1]} : vector<2x24xf32> to vector<2x8xf32>
    %466 = vector.extract_strided_slice %462 {offsets = [0, 8], sizes = [2, 8], strides = [1, 1]} : vector<2x24xf32> to vector<2x8xf32>
    %467 = vector.extract_strided_slice %462 {offsets = [0, 16], sizes = [2, 8], strides = [1, 1]} : vector<2x24xf32> to vector<2x8xf32>
    %468 = arith.mulf %466, %413 : vector<2x8xf32>
    %469 = arith.mulf %465, %464 : vector<2x8xf32>
    %470 = arith.addf %468, %469 : vector<2x8xf32>
    %471 = math.tanh %470 : vector<2x8xf32>
    %472 = arith.mulf %467, %471 : vector<2x8xf32>
    %c0_19 = arith.constant 0 : index
    %c0_20 = arith.constant 0 : index
    %473 = vector.load %arg9[%c0_19, %c0_20] : memref<2x8xf32, #tpu.memory_space<vmem>>, vector<2x8xf32>
    tpu.vector_store %arg9[%c0_19, %c0_20], %472 {strides = array<i32>} : memref<2x8xf32, #tpu.memory_space<vmem>>, vector<2x8xf32>,
    %c0_21 = arith.constant 0 : index
    %c0_22 = arith.constant 0 : index
    %474 = vector.load %arg10[%c0_21, %c0_22] : memref<2x8xf32, #tpu.memory_space<vmem>>, vector<2x8xf32>
    tpu.vector_store %arg10[%c0_21, %c0_22], %470 {strides = array<i32>} : memref<2x8xf32, #tpu.memory_space<vmem>>, vector<2x8xf32>,
    %c0_23 = arith.constant 0 : index
    %c0_24 = arith.constant 0 : index
    %475 = vector.load %arg6[%c0_23, %c0_24] : memref<8x128xf32, #tpu.memory_space<vmem>>, vector<8x128xf32>
    %cst_25 = arith.constant dense<0.000000e+00> : vector<2x128xf32>
    %476 = tpu.matmul %472, %475, %cst_25 {dimension_numbers = #tpu.dot_dimension_numbers<[1], [0], [0], [1], [0, 0, 1, 1], [], []>} : vector<2x8xf32>, vector<8x128xf32>, vector<2x128xf32> -> vector<2x128xf32>
    %c0_26 = arith.constant 0 : index
    %c0_27 = arith.constant 0 : index
    %477 = vector.load %arg7[%c0_26, %c0_27] : memref<1x128xf32, #tpu.memory_space<vmem>>, vector<1x128xf32>
    %478 = vector.broadcast %477 : vector<1x128xf32> to vector<2x128xf32>
    %479 = arith.addf %476, %478 : vector<2x128xf32>
    %c0_28 = arith.constant 0 : index
    %c0_29 = arith.constant 0 : index
    %480 = vector.load %arg8[%c0_28, %c0_29] : memref<2x128xf32, #tpu.memory_space<vmem>>, vector<2x128xf32>
    tpu.vector_store %arg8[%c0_28, %c0_29], %479 {strides = array<i32>} : memref<2x128xf32, #tpu.memory_space<vmem>>, vector<2x128xf32>,
    return
  }
}

</mosaic_0001>

<llo_original>
// kernel: network_forward.1
$region0: #{network_forward.1}
  #allocation0 [shape = 'u32[]', space=smem, size = 0x4, offset = 0x4, fixed_abs, tag = 'smem constant byte address 0x4 - core index']
  #allocation1 [shape = 'u32[144,128]{1,0:T(1,128)}', space=vmem, size = 0x12000, scoped, tag = 'internal scratch']
  %s0 = inlined_call_operand.vmem [shape: f32[16,2], index: 0, kind: input, shape index: {}]
  %s1 = inlined_call_operand.vmem [shape: f32[2,8], index: 1, kind: input, shape index: {}, may-alias: {1,2}]
  %s2 = inlined_call_operand.vmem [shape: f32[2,8], index: 2, kind: input, shape index: {}, may-alias: {1,2}]
  %s3 = inlined_call_operand.vmem [shape: f32[2,32], index: 3, kind: input, shape index: {}]
  %s4 = inlined_call_operand.vmem [shape: f32[8,32], index: 4, kind: input, shape index: {}]
  %s5 = inlined_call_operand.vmem [shape: f32[1,32], index: 5, kind: input, shape index: {}]
  %s6 = inlined_call_operand.vmem [shape: f32[8,128], index: 6, kind: input, shape index: {}]
  %s7 = inlined_call_operand.vmem [shape: f32[1,128], index: 7, kind: input, shape index: {}]
  %s8 = inlined_call_operand.hbm [shape: f32[2,128], index: 8, kind: output, shape index: {0}]
  %s9 = inlined_call_operand.hbm [shape: f32[2,8], index: 9, kind: output, shape index: {1}]
  %s10 = inlined_call_operand.hbm [shape: f32[2,8], index: 10, kind: output, shape index: {2}]
  %11 = xla_tuple %s8, %s9, %s10
  %s12 = sld [smem:[#allocation0]]
  $region58: #{network_forward.1} parent=0
    _
  %s14 = ssub.s32 1, %s12
  %s15 = scalar_select 0, %s14, %s12
  $region1: #{network_forward.1} parent=0
    #allocation2 [shape = 'u8[1024]{0}', space=vmem, size = 0x400, scoped, tag = 'output window, operand 0, single buffered']
    #allocation3 [shape = 's32[1]{0}', space=sflag, size = 0x4, scoped, tag = 'scoped memory for network_forward.1']
    #allocation4 [shape = 'u8[1024]{0}', space=vmem, size = 0x400, scoped, tag = 'output window, operand 1, single buffered']
    #allocation5 [shape = 's32[1]{0}', space=sflag, size = 0x4, scoped, tag = 'scoped memory for network_forward.1']
    #allocation6 [shape = 'u8[1024]{0}', space=vmem, size = 0x400, scoped, tag = 'output window, operand 2, single buffered']
    %16 = vsyncpa [#allocation3], 0
    %17 = vsyncpa [#allocation5], 0
    // Predicated region
    $region2: #{network_forward.1} parent=1 // pred_check
      _
    $region3: #{network_forward.1} parent=1 // pred_check_branch
      %19 = sbr.rel (0) target = $region5
    $region4: #{network_forward.1} parent=1 // pred_region
      _
    $region5: #{network_forward.1} parent=1 // pred_fallthru
      _
    // Predicated region
    $region6: #{network_forward.1} parent=1 // pred_check
      _
    $region7: #{network_forward.1} parent=1 // pred_check_branch
      %21 = sbr.rel (0) target = $region9
    $region8: #{network_forward.1} parent=1 // pred_region
      _
    $region9: #{network_forward.1} parent=1 // pred_fallthru
      _
    // Predicated region
    $region10: #{network_forward.1} parent=1 // pred_check
      _
    $region11: #{network_forward.1} parent=1 // pred_check_branch
      %23 = sbr.rel (0) target = $region13
    $region12: #{network_forward.1} parent=1 // pred_region
      _
    $region13: #{network_forward.1} parent=1 // pred_fallthru
      _
    // Predicated region
    $region14: #{network_forward.1} parent=1 // pred_check
      _
    $region15: #{network_forward.1} parent=1 // pred_check_branch
      %25 = sbr.rel (0) target = $region17
    $region16: #{network_forward.1} parent=1 // pred_region
      _
    $region17: #{network_forward.1} parent=1 // pred_fallthru
      _
    // Predicated region
    $region18: #{network_forward.1} parent=1 // pred_check
      _
    $region19: #{network_forward.1} parent=1 // pred_check_branch
      %27 = sbr.rel (0) target = $region21
    $region20: #{network_forward.1} parent=1 // pred_region
      _
    $region21: #{network_forward.1} parent=1 // pred_fallthru
      _
    // Predicated region
    $region22: #{network_forward.1} parent=1 // pred_check
      _
    $region23: #{network_forward.1} parent=1 // pred_check_branch
      %29 = sbr.rel (0) target = $region25
    $region24: #{network_forward.1} parent=1 // pred_region
      _
    $region25: #{network_forward.1} parent=1 // pred_fallthru
      _
    // Predicated region
    $region26: #{network_forward.1} parent=1 // pred_check
      _
    $region27: #{network_forward.1} parent=1 // pred_check_branch
      %31 = sbr.rel (0) target = $region29
    $region28: #{network_forward.1} parent=1 // pred_region
      _
    $region29: #{network_forward.1} parent=1 // pred_fallthru
      _
    // Predicated region
    $region30: #{network_forward.1} parent=1 // pred_check
      _
    $region31: #{network_forward.1} parent=1 // pred_check_branch
      %33 = sbr.rel (0) target = $region33
    $region32: #{network_forward.1} parent=1 // pred_region
      _
    $region33: #{network_forward.1} parent=1 // pred_fallthru
      _
    %v34 = vld [vmem:[%s0] sm:$0xff]
    %v35 = vld [vmem:[%s0 + $0x8] sm:$0xff]
    %v36 = vld [vmem:[%s3] sm:$0x3]
    %v37 = vld [vmem:[%s5] sm:$0x1]
    %v39 = vlaneseq
    %v40 = vshrl.u32 %v39, 7
    %v41 = vsub.s32 0, %v40
    %v42 = vrot.slane %v37, %v41
    %vm44 = vcmask 15360
    %v46 = vsel %vm44, %v34, 0
    %v49 = vsel %vm44, %v35, 0
    %vm51 = vcmask 1041408
    %v53 = vsel %vm51, %v36, 0
    %55 = vmatprep.subr.mxu0 0.0
    %56 = vmatpush1.msra.mxu0 %v53
    %57 = vmatprep.subr.mxu0 0.0
    %58 = vmatpush1.msra.mxu0 0.0
    %59 = vmatprep.subr.mxu0 0.0
    %60 = vmatpush1.msra.mxu0 0.0
    %61 = vmatprep.subr.mxu0 0.0
    %62 = vmatpush1.msra.mxu0 0.0
    %63 = vmatprep.subr.mxu0 0.0
    %64 = vmatpush1.msra.mxu0 0.0
    %65 = vmatprep.subr.mxu0 0.0
    %66 = vmatpush1.msra.mxu0 0.0
    %67 = vmatprep.subr.mxu0 0.0
    %68 = vmatpush1.msra.mxu0 0.0
    %69 = vmatprep.subr.mxu0 0.0
    %70 = vmatpush1.msra.mxu0 0.0
    %71 = vmatprep.subr.mxu0 0.0
    %72 = vmatpush1.msra.mxu0 0.0
    %73 = vmatprep.subr.mxu0 0.0
    %74 = vmatpush1.msra.mxu0 0.0
    %75 = vmatprep.subr.mxu0 0.0
    %76 = vmatpush1.msra.mxu0 0.0
    %77 = vmatprep.subr.mxu0 0.0
    %78 = vmatpush1.msra.mxu0 0.0
    %79 = vmatprep.subr.mxu0 0.0
    %80 = vmatpush1.msra.mxu0 0.0
    %81 = vmatprep.subr.mxu0 0.0
    %82 = vmatpush1.msra.mxu0 0.0
    %83 = vmatprep.subr.mxu0 0.0
    %84 = vmatpush1.msra.mxu0 0.0
    %85 = vmatprep.subr.mxu0 0.0
    %86 = vmatpush1.msra.mxu0 0.0
    %87 = vmatprep.subr.mxu0 0.0
    %88 = vmatpush1.msra.mxu0 0.0
    %89 = vmatprep.subr.mxu0 0.0
    %90 = vmatpush1.msra.mxu0 0.0
    %91 = vmatprep.subr.mxu0 0.0
    %92 = vmatpush1.msra.mxu0 0.0
    %93 = vmatprep.subr.mxu0 0.0
    %94 = vmatpush1.msra.mxu0 0.0
    %95 = vmatprep.subr.mxu0 0.0
    %96 = vmatpush1.msra.mxu0 0.0
    %97 = vmatprep.subr.mxu0 0.0
    %98 = vmatpush1.msra.mxu0 0.0
    %99 = vmatprep.subr.mxu0 0.0
    %100 = vmatpush1.msra.mxu0 0.0
    %101 = vmatprep.subr.mxu0 0.0
    %102 = vmatpush1.msra.mxu0 0.0
    %103 = vmatprep.subr.mxu0 0.0
    %104 = vmatpush1.msra.mxu0 0.0
    %105 = vmatprep.subr.mxu0 0.0
    %106 = vmatpush1.msra.mxu0 0.0
    %107 = vmatprep.subr.mxu0 0.0
    %108 = vmatpush1.msra.mxu0 0.0
    %109 = vmatprep.subr.mxu0 0.0
    %110 = vmatpush1.msra.mxu0 0.0
    %111 = vmatprep.subr.mxu0 0.0
    %112 = vmatpush1.msra.mxu0 0.0
    %113 = vmatprep.subr.mxu0 0.0
    %114 = vmatpush1.msra.mxu0 0.0
    %115 = vmatprep.subr.mxu0 0.0
    %116 = vmatpush1.msra.mxu0 0.0
    %117 = vmatprep.subr.mxu0 0.0
    %118 = vmatpush1.msra.mxu0 0.0
    %119 = vmatprep.mubr.f32.mxu0 0.0
    %120 = vmatmul.mubr.f32.gmra.mrb[0].mxu0 %v46
    %v121 = vpop.f32.mrb[0].mxu0
    %v122 = vadd.f32 %v42, %v121
    %v123 = vpop.f32.mrb[0].mxu0
    %124 = vmatprep.mubr.f32.mxu0 0.0
    %125 = vmatmul.mubr.f32.gmra.mrb[0].mxu0 %v49
    %v126 = vpop.f32.mrb[0].mxu0
    %v127 = vadd.f32 %v42, %v126
    %v128 = vpop.f32.mrb[0].mxu0
    %129 = vdwg.mxu0
    %v130 = vld [vmem:[%s4] sm:$0xff]
    %v131 = vld [vmem:[%s1] sm:$0x3]
    %v132 = vld [vmem:[%s2] sm:$0x3]
    %134 = vset.pattern.permute.xlu0 0
    %135 = vperm.xlu0 %134, %v131
    %v136 = vpop.permute.xlu0 %135
    %v138 = vlaneseq
    %v139 = vshrl.u32 %v138, 7
    %v140 = vsub.s32 0, %v139
    %v141 = vrot.slane %v130, %v140
    %v142 = vmul.f32 %v136, %v141
    %143 = vset.pattern.permute.xlu0 1
    %144 = vperm.xlu0 %143, %v131
    %v145 = vpop.permute.xlu0 %144
    %v147 = vlaneseq
    %v148 = vshrl.u32 %v147, 7
    %v149 = vsub.s32 1, %v148
    %v150 = vrot.slane %v130, %v149
    %v151 = vmul.f32 %v145, %v150
    %152 = vset.pattern.permute.xlu0 2
    %153 = vperm.xlu0 %152, %v131
    %v154 = vpop.permute.xlu0 %153
    %v156 = vlaneseq
    %v157 = vshrl.u32 %v156, 7
    %v158 = vsub.s32 2, %v157
    %v159 = vrot.slane %v130, %v158
    %v160 = vmul.f32 %v154, %v159
    %161 = vset.pattern.permute.xlu0 3
    %162 = vperm.xlu0 %161, %v131
    %v163 = vpop.permute.xlu0 %162
    %v165 = vlaneseq
    %v166 = vshrl.u32 %v165, 7
    %v167 = vsub.s32 3, %v166
    %v168 = vrot.slane %v130, %v167
    %v169 = vmul.f32 %v163, %v168
    %170 = vset.pattern.permute.xlu0 4
    %171 = vperm.xlu0 %170, %v131
    %v172 = vpop.permute.xlu0 %171
    %v174 = vlaneseq
    %v175 = vshrl.u32 %v174, 7
    %v176 = vsub.s32 4, %v175
    %v177 = vrot.slane %v130, %v176
    %v178 = vmul.f32 %v172, %v177
    %179 = vset.pattern.permute.xlu0 5
    %180 = vperm.xlu0 %179, %v131
    %v181 = vpop.permute.xlu0 %180
    %v183 = vlaneseq
    %v184 = vshrl.u32 %v183, 7
    %v185 = vsub.s32 5, %v184
    %v186 = vrot.slane %v130, %v185
    %v187 = vmul.f32 %v181, %v186
    %188 = vset.pattern.permute.xlu0 6
    %189 = vperm.xlu0 %188, %v131
    %v190 = vpop.permute.xlu0 %189
    %v192 = vlaneseq
    %v193 = vshrl.u32 %v192, 7
    %v194 = vsub.s32 6, %v193
    %v195 = vrot.slane %v130, %v194
    %v196 = vmul.f32 %v190, %v195
    %197 = vset.pattern.permute.xlu0 7
    %198 = vperm.xlu0 %197, %v131
    %v199 = vpop.permute.xlu0 %198
    %v201 = vlaneseq
    %v202 = vshrl.u32 %v201, 7
    %v203 = vsub.s32 7, %v202
    %v204 = vrot.slane %v130, %v203
    %v205 = vmul.f32 %v199, %v204
    %v206 = vadd.f32 %v142, %v151
    %v207 = vadd.f32 %v160, %v169
    %v208 = vadd.f32 %v178, %v187
    %v209 = vadd.f32 %v196, %v205
    %v210 = vadd.f32 %v206, %v207
    %v211 = vadd.f32 %v208, %v209
    %v212 = vadd.f32 %v210, %v211
    %v213 = vadd.f32 %v122, %v212
    %v214 = vxor.u32 %v213, 2147483648
    %v215 = vmul.f32 %v214, 1.442695
    %v216 = vpow.pop %v215
    %v217 = vadd.f32 %v216, 1.0
    %v218 = vrcp.pop %v217
    %v219 = vmul.f32 1.0, %v218
    %v220 = vtanh.pop %v213
    %222 = vrot.lane.b32.xlu0 %v132, 8
    %v223 = vpop.permute.xlu0 %222
    %v225 = vmul.f32 %v219, %v223
    %227 = vrot.lane.b32.xlu0 %v220, 104
    %v228 = vpop.permute.xlu0 %227
    %v230 = vmul.f32 %v219, %v228
    %232 = vrot.lane.b32.xlu0 %v230, 8
    %v233 = vpop.permute.xlu0 %232
    %v235 = vadd.f32 %v225, %v233
    %v236 = vtanh.pop %v235
    %238 = vrot.lane.b32.xlu0 %v236, 8
    %v239 = vpop.permute.xlu0 %238
    %v241 = vmul.f32 %v219, %v239
    %243 = vset.pattern.permute.xlu0 16
    %244 = vperm.xlu0 %243, %v241
    %v245 = vpop.permute.xlu0 %244
    %v247 = vmul.f32 %v245, %v141
    %248 = vset.pattern.permute.xlu0 17
    %249 = vperm.xlu0 %248, %v241
    %v250 = vpop.permute.xlu0 %249
    %v252 = vmul.f32 %v250, %v150
    %253 = vset.pattern.permute.xlu0 18
    %254 = vperm.xlu0 %253, %v241
    %v255 = vpop.permute.xlu0 %254
    %v257 = vmul.f32 %v255, %v159
    %258 = vset.pattern.permute.xlu0 19
    %259 = vperm.xlu0 %258, %v241
    %v260 = vpop.permute.xlu0 %259
    %v262 = vmul.f32 %v260, %v168
    %263 = vset.pattern.permute.xlu0 20
    %264 = vperm.xlu0 %263, %v241
    %v265 = vpop.permute.xlu0 %264
    %v267 = vmul.f32 %v265, %v177
    %268 = vset.pattern.permute.xlu0 21
    %269 = vperm.xlu0 %268, %v241
    %v270 = vpop.permute.xlu0 %269
    %v272 = vmul.f32 %v270, %v186
    %273 = vset.pattern.permute.xlu0 22
    %274 = vperm.xlu0 %273, %v241
    %v275 = vpop.permute.xlu0 %274
    %v277 = vmul.f32 %v275, %v195
    %278 = vset.pattern.permute.xlu0 23
    %279 = vperm.xlu0 %278, %v241
    %v280 = vpop.permute.xlu0 %279
    %v282 = vmul.f32 %v280, %v204
    %v283 = vadd.f32 %v247, %v252
    %v284 = vadd.f32 %v257, %v262
    %v285 = vadd.f32 %v267, %v272
    %v286 = vadd.f32 %v277, %v282
    %v287 = vadd.f32 %v283, %v284
    %v288 = vadd.f32 %v285, %v286
    %v289 = vadd.f32 %v287, %v288
    %v291 = vrot.slane %v289, 6
    %v293 = vadd.f32 %v122, %v291
    %v294 = vxor.u32 %v293, 2147483648
    %v295 = vmul.f32 %v294, 1.442695
    %v296 = vpow.pop %v295
    %v297 = vadd.f32 %v296, 1.0
    %v298 = vrcp.pop %v297
    %v299 = vmul.f32 1.0, %v298
    %v300 = vtanh.pop %v293
    %v302 = vrot.slane %v235, 6
    %v304 = vmul.f32 %v299, %v302
    %306 = vrot.lane.b32.xlu0 %v300, 104
    %v307 = vpop.permute.xlu0 %306
    %v309 = vmul.f32 %v299, %v307
    %311 = vrot.lane.b32.xlu0 %v309, 8
    %v312 = vpop.permute.xlu0 %311
    %v314 = vadd.f32 %v304, %v312
    %v315 = vtanh.pop %v314
    %317 = vrot.lane.b32.xlu0 %v315, 8
    %v318 = vpop.permute.xlu0 %317
    %v320 = vmul.f32 %v299, %v318
    %322 = vset.pattern.permute.xlu0 16
    %323 = vperm.xlu0 %322, %v320
    %v324 = vpop.permute.xlu0 %323
    %v326 = vmul.f32 %v324, %v141
    %327 = vset.pattern.permute.xlu0 17
    %328 = vperm.xlu0 %327, %v320
    %v329 = vpop.permute.xlu0 %328
    %v331 = vmul.f32 %v329, %v150
    %332 = vset.pattern.permute.xlu0 18
    %333 = vperm.xlu0 %332, %v320
    %v334 = vpop.permute.xlu0 %333
    %v336 = vmul.f32 %v334, %v159
    %337 = vset.pattern.permute.xlu0 19
    %338 = vperm.xlu0 %337, %v320
    %v339 = vpop.permute.xlu0 %338
    %v341 = vmul.f32 %v339, %v168
    %342 = vset.pattern.permute.xlu0 20
    %343 = vperm.xlu0 %342, %v320
    %v344 = vpop.permute.xlu0 %343
    %v346 = vmul.f32 %v344, %v177
    %347 = vset.pattern.permute.xlu0 21
    %348 = vperm.xlu0 %347, %v320
    %v349 = vpop.permute.xlu0 %348
    %v351 = vmul.f32 %v349, %v186
    %352 = vset.pattern.permute.xlu0 22
    %353 = vperm.xlu0 %352, %v320
    %v354 = vpop.permute.xlu0 %353
    %v356 = vmul.f32 %v354, %v195
    %357 = vset.pattern.permute.xlu0 23
    %358 = vperm.xlu0 %357, %v320
    %v359 = vpop.permute.xlu0 %358
    %v361 = vmul.f32 %v359, %v204
    %v362 = vadd.f32 %v326, %v331
    %v363 = vadd.f32 %v336, %v341
    %v364 = vadd.f32 %v346, %v351
    %v365 = vadd.f32 %v356, %v361
    %v366 = vadd.f32 %v362, %v363
    %v367 = vadd.f32 %v364, %v365
    %v368 = vadd.f32 %v366, %v367
    %v370 = vrot.slane %v368, 6
    %v372 = vadd.f32 %v122, %v370
    %v373 = vxor.u32 %v372, 2147483648
    %v374 = vmul.f32 %v373, 1.442695
    %v375 = vpow.pop %v374
    %v376 = vadd.f32 %v375, 1.0
    %v377 = vrcp.pop %v376
    %v378 = vmul.f32 1.0, %v377
    %v379 = vtanh.pop %v372
    %v381 = vrot.slane %v314, 6
    %v383 = vmul.f32 %v378, %v381
    %385 = vrot.lane.b32.xlu0 %v379, 104
    %v386 = vpop.permute.xlu0 %385
    %v388 = vmul.f32 %v378, %v386
    %390 = vrot.lane.b32.xlu0 %v388, 8
    %v391 = vpop.permute.xlu0 %390
    %v393 = vadd.f32 %v383, %v391
    %v394 = vtanh.pop %v393
    %396 = vrot.lane.b32.xlu0 %v394, 8
    %v397 = vpop.permute.xlu0 %396
    %v399 = vmul.f32 %v378, %v397
    %401 = vset.pattern.permute.xlu0 16
    %402 = vperm.xlu0 %401, %v399
    %v403 = vpop.permute.xlu0 %402
    %v405 = vmul.f32 %v403, %v141
    %406 = vset.pattern.permute.xlu0 17
    %407 = vperm.xlu0 %406, %v399
    %v408 = vpop.permute.xlu0 %407
    %v410 = vmul.f32 %v408, %v150
    %411 = vset.pattern.permute.xlu0 18
    %412 = vperm.xlu0 %411, %v399
    %v413 = vpop.permute.xlu0 %412
    %v415 = vmul.f32 %v413, %v159
    %416 = vset.pattern.permute.xlu0 19
    %417 = vperm.xlu0 %416, %v399
    %v418 = vpop.permute.xlu0 %417
    %v420 = vmul.f32 %v418, %v168
    %421 = vset.pattern.permute.xlu0 20
    %422 = vperm.xlu0 %421, %v399
    %v423 = vpop.permute.xlu0 %422
    %v425 = vmul.f32 %v423, %v177
    %426 = vset.pattern.permute.xlu0 21
    %427 = vperm.xlu0 %426, %v399
    %v428 = vpop.permute.xlu0 %427
    %v430 = vmul.f32 %v428, %v186
    %431 = vset.pattern.permute.xlu0 22
    %432 = vperm.xlu0 %431, %v399
    %v433 = vpop.permute.xlu0 %432
    %v435 = vmul.f32 %v433, %v195
    %436 = vset.pattern.permute.xlu0 23
    %437 = vperm.xlu0 %436, %v399
    %v438 = vpop.permute.xlu0 %437
    %v440 = vmul.f32 %v438, %v204
    %v441 = vadd.f32 %v405, %v410
    %v442 = vadd.f32 %v415, %v420
    %v443 = vadd.f32 %v425, %v430
    %v444 = vadd.f32 %v435, %v440
    %v445 = vadd.f32 %v441, %v442
    %v446 = vadd.f32 %v443, %v444
    %v447 = vadd.f32 %v445, %v446
    %v449 = vrot.slane %v447, 6
    %v451 = vadd.f32 %v122, %v449
    %v452 = vxor.u32 %v451, 2147483648
    %v453 = vmul.f32 %v452, 1.442695
    %v454 = vpow.pop %v453
    %v455 = vadd.f32 %v454, 1.0
    %v456 = vrcp.pop %v455
    %v457 = vmul.f32 1.0, %v456
    %v458 = vtanh.pop %v451
    %v460 = vrot.slane %v393, 6
    %v462 = vmul.f32 %v457, %v460
    %464 = vrot.lane.b32.xlu0 %v458, 104
    %v465 = vpop.permute.xlu0 %464
    %v467 = vmul.f32 %v457, %v465
    %469 = vrot.lane.b32.xlu0 %v467, 8
    %v470 = vpop.permute.xlu0 %469
    %v472 = vadd.f32 %v462, %v470
    %v473 = vtanh.pop %v472
    %475 = vrot.lane.b32.xlu0 %v473, 8
    %v476 = vpop.permute.xlu0 %475
    %v478 = vmul.f32 %v457, %v476
    %480 = vset.pattern.permute.xlu0 16
    %481 = vperm.xlu0 %480, %v478
    %v482 = vpop.permute.xlu0 %481
    %v484 = vmul.f32 %v482, %v141
    %485 = vset.pattern.permute.xlu0 17
    %486 = vperm.xlu0 %485, %v478
    %v487 = vpop.permute.xlu0 %486
    %v489 = vmul.f32 %v487, %v150
    %490 = vset.pattern.permute.xlu0 18
    %491 = vperm.xlu0 %490, %v478
    %v492 = vpop.permute.xlu0 %491
    %v494 = vmul.f32 %v492, %v159
    %495 = vset.pattern.permute.xlu0 19
    %496 = vperm.xlu0 %495, %v478
    %v497 = vpop.permute.xlu0 %496
    %v499 = vmul.f32 %v497, %v168
    %500 = vset.pattern.permute.xlu0 20
    %501 = vperm.xlu0 %500, %v478
    %v502 = vpop.permute.xlu0 %501
    %v504 = vmul.f32 %v502, %v177
    %505 = vset.pattern.permute.xlu0 21
    %506 = vperm.xlu0 %505, %v478
    %v507 = vpop.permute.xlu0 %506
    %v509 = vmul.f32 %v507, %v186
    %510 = vset.pattern.permute.xlu0 22
    %511 = vperm.xlu0 %510, %v478
    %v512 = vpop.permute.xlu0 %511
    %v514 = vmul.f32 %v512, %v195
    %515 = vset.pattern.permute.xlu0 23
    %516 = vperm.xlu0 %515, %v478
    %v517 = vpop.permute.xlu0 %516
    %v519 = vmul.f32 %v517, %v204
    %v520 = vadd.f32 %v484, %v489
    %v521 = vadd.f32 %v494, %v499
    %v522 = vadd.f32 %v504, %v509
    %v523 = vadd.f32 %v514, %v519
    %v524 = vadd.f32 %v520, %v521
    %v525 = vadd.f32 %v522, %v523
    %v526 = vadd.f32 %v524, %v525
    %v528 = vrot.slane %v526, 6
    %v530 = vadd.f32 %v127, %v528
    %v531 = vxor.u32 %v530, 2147483648
    %v532 = vmul.f32 %v531, 1.442695
    %v533 = vpow.pop %v532
    %v534 = vadd.f32 %v533, 1.0
    %v535 = vrcp.pop %v534
    %v536 = vmul.f32 1.0, %v535
    %v537 = vtanh.pop %v530
    %v539 = vrot.slane %v472, 6
    %v541 = vmul.f32 %v536, %v539
    %543 = vrot.lane.b32.xlu0 %v537, 104
    %v544 = vpop.permute.xlu0 %543
    %v546 = vmul.f32 %v536, %v544
    %548 = vrot.lane.b32.xlu0 %v546, 8
    %v549 = vpop.permute.xlu0 %548
    %v551 = vadd.f32 %v541, %v549
    %v552 = vtanh.pop %v551
    %554 = vrot.lane.b32.xlu0 %v552, 8
    %v555 = vpop.permute.xlu0 %554
    %v557 = vmul.f32 %v536, %v555
    %559 = vset.pattern.permute.xlu0 16
    %560 = vperm.xlu0 %559, %v557
    %v561 = vpop.permute.xlu0 %560
    %v563 = vmul.f32 %v561, %v141
    %564 = vset.pattern.permute.xlu0 17
    %565 = vperm.xlu0 %564, %v557
    %v566 = vpop.permute.xlu0 %565
    %v568 = vmul.f32 %v566, %v150
    %569 = vset.pattern.permute.xlu0 18
    %570 = vperm.xlu0 %569, %v557
    %v571 = vpop.permute.xlu0 %570
    %v573 = vmul.f32 %v571, %v159
    %574 = vset.pattern.permute.xlu0 19
    %575 = vperm.xlu0 %574, %v557
    %v576 = vpop.permute.xlu0 %575
    %v578 = vmul.f32 %v576, %v168
    %579 = vset.pattern.permute.xlu0 20
    %580 = vperm.xlu0 %579, %v557
    %v581 = vpop.permute.xlu0 %580
    %v583 = vmul.f32 %v581, %v177
    %584 = vset.pattern.permute.xlu0 21
    %585 = vperm.xlu0 %584, %v557
    %v586 = vpop.permute.xlu0 %585
    %v588 = vmul.f32 %v586, %v186
    %589 = vset.pattern.permute.xlu0 22
    %590 = vperm.xlu0 %589, %v557
    %v591 = vpop.permute.xlu0 %590
    %v593 = vmul.f32 %v591, %v195
    %594 = vset.pattern.permute.xlu0 23
    %595 = vperm.xlu0 %594, %v557
    %v596 = vpop.permute.xlu0 %595
    %v598 = vmul.f32 %v596, %v204
    %v599 = vadd.f32 %v563, %v568
    %v600 = vadd.f32 %v573, %v578
    %v601 = vadd.f32 %v583, %v588
    %v602 = vadd.f32 %v593, %v598
    %v603 = vadd.f32 %v599, %v600
    %v604 = vadd.f32 %v601, %v602
    %v605 = vadd.f32 %v603, %v604
    %v607 = vrot.slane %v605, 6
    %v609 = vadd.f32 %v127, %v607
    %v610 = vxor.u32 %v609, 2147483648
    %v611 = vmul.f32 %v610, 1.442695
    %v612 = vpow.pop %v611
    %v613 = vadd.f32 %v612, 1.0
    %v614 = vrcp.pop %v613
    %v615 = vmul.f32 1.0, %v614
    %v616 = vtanh.pop %v609
    %v618 = vrot.slane %v551, 6
    %v620 = vmul.f32 %v615, %v618
    %622 = vrot.lane.b32.xlu0 %v616, 104
    %v623 = vpop.permute.xlu0 %622
    %v625 = vmul.f32 %v615, %v623
    %627 = vrot.lane.b32.xlu0 %v625, 8
    %v628 = vpop.permute.xlu0 %627
    %v630 = vadd.f32 %v620, %v628
    %v631 = vtanh.pop %v630
    %633 = vrot.lane.b32.xlu0 %v631, 8
    %v634 = vpop.permute.xlu0 %633
    %v636 = vmul.f32 %v615, %v634
    %638 = vset.pattern.permute.xlu0 16
    %639 = vperm.xlu0 %638, %v636
    %v640 = vpop.permute.xlu0 %639
    %v642 = vmul.f32 %v640, %v141
    %643 = vset.pattern.permute.xlu0 17
    %644 = vperm.xlu0 %643, %v636
    %v645 = vpop.permute.xlu0 %644
    %v647 = vmul.f32 %v645, %v150
    %648 = vset.pattern.permute.xlu0 18
    %649 = vperm.xlu0 %648, %v636
    %v650 = vpop.permute.xlu0 %649
    %v652 = vmul.f32 %v650, %v159
    %653 = vset.pattern.permute.xlu0 19
    %654 = vperm.xlu0 %653, %v636
    %v655 = vpop.permute.xlu0 %654
    %v657 = vmul.f32 %v655, %v168
    %658 = vset.pattern.permute.xlu0 20
    %659 = vperm.xlu0 %658, %v636
    %v660 = vpop.permute.xlu0 %659
    %v662 = vmul.f32 %v660, %v177
    %663 = vset.pattern.permute.xlu0 21
    %664 = vperm.xlu0 %663, %v636
    %v665 = vpop.permute.xlu0 %664
    %v667 = vmul.f32 %v665, %v186
    %668 = vset.pattern.permute.xlu0 22
    %669 = vperm.xlu0 %668, %v636
    %v670 = vpop.permute.xlu0 %669
    %v672 = vmul.f32 %v670, %v195
    %673 = vset.pattern.permute.xlu0 23
    %674 = vperm.xlu0 %673, %v636
    %v675 = vpop.permute.xlu0 %674
    %v677 = vmul.f32 %v675, %v204
    %v678 = vadd.f32 %v642, %v647
    %v679 = vadd.f32 %v652, %v657
    %v680 = vadd.f32 %v662, %v667
    %v681 = vadd.f32 %v672, %v677
    %v682 = vadd.f32 %v678, %v679
    %v683 = vadd.f32 %v680, %v681
    %v684 = vadd.f32 %v682, %v683
    %v686 = vrot.slane %v684, 6
    %v688 = vadd.f32 %v127, %v686
    %v689 = vxor.u32 %v688, 2147483648
    %v690 = vmul.f32 %v689, 1.442695
    %v691 = vpow.pop %v690
    %v692 = vadd.f32 %v691, 1.0
    %v693 = vrcp.pop %v692
    %v694 = vmul.f32 1.0, %v693
    %v695 = vtanh.pop %v688
    %v697 = vrot.slane %v630, 6
    %v699 = vmul.f32 %v694, %v697
    %701 = vrot.lane.b32.xlu0 %v695, 104
    %v702 = vpop.permute.xlu0 %701
    %v704 = vmul.f32 %v694, %v702
    %706 = vrot.lane.b32.xlu0 %v704, 8
    %v707 = vpop.permute.xlu0 %706
    %v709 = vadd.f32 %v699, %v707
    %v710 = vtanh.pop %v709
    %712 = vrot.lane.b32.xlu0 %v710, 8
    %v713 = vpop.permute.xlu0 %712
    %v715 = vmul.f32 %v694, %v713
    %717 = vset.pattern.permute.xlu0 16
    %718 = vperm.xlu0 %717, %v715
    %v719 = vpop.permute.xlu0 %718
    %v721 = vmul.f32 %v719, %v141
    %722 = vset.pattern.permute.xlu0 17
    %723 = vperm.xlu0 %722, %v715
    %v724 = vpop.permute.xlu0 %723
    %v726 = vmul.f32 %v724, %v150
    %727 = vset.pattern.permute.xlu0 18
    %728 = vperm.xlu0 %727, %v715
    %v729 = vpop.permute.xlu0 %728
    %v731 = vmul.f32 %v729, %v159
    %732 = vset.pattern.permute.xlu0 19
    %733 = vperm.xlu0 %732, %v715
    %v734 = vpop.permute.xlu0 %733
    %v736 = vmul.f32 %v734, %v168
    %737 = vset.pattern.permute.xlu0 20
    %738 = vperm.xlu0 %737, %v715
    %v739 = vpop.permute.xlu0 %738
    %v741 = vmul.f32 %v739, %v177
    %742 = vset.pattern.permute.xlu0 21
    %743 = vperm.xlu0 %742, %v715
    %v744 = vpop.permute.xlu0 %743
    %v746 = vmul.f32 %v744, %v186
    %747 = vset.pattern.permute.xlu0 22
    %748 = vperm.xlu0 %747, %v715
    %v749 = vpop.permute.xlu0 %748
    %v751 = vmul.f32 %v749, %v195
    %752 = vset.pattern.permute.xlu0 23
    %753 = vperm.xlu0 %752, %v715
    %v754 = vpop.permute.xlu0 %753
    %v756 = vmul.f32 %v754, %v204
    %v757 = vadd.f32 %v721, %v726
    %v758 = vadd.f32 %v731, %v736
    %v759 = vadd.f32 %v741, %v746
    %v760 = vadd.f32 %v751, %v756
    %v761 = vadd.f32 %v757, %v758
    %v762 = vadd.f32 %v759, %v760
    %v763 = vadd.f32 %v761, %v762
    %v765 = vrot.slane %v763, 6
    %v767 = vadd.f32 %v127, %v765
    %v768 = vxor.u32 %v767, 2147483648
    %v769 = vmul.f32 %v768, 1.442695
    %v770 = vpow.pop %v769
    %v771 = vadd.f32 %v770, 1.0
    %v772 = vrcp.pop %v771
    %v773 = vmul.f32 1.0, %v772
    %v774 = vtanh.pop %v767
    %v776 = vrot.slane %v709, 6
    %v778 = vmul.f32 %v773, %v776
    %780 = vrot.lane.b32.xlu0 %v774, 104
    %v781 = vpop.permute.xlu0 %780
    %v783 = vmul.f32 %v773, %v781
    %785 = vrot.lane.b32.xlu0 %v783, 8
    %v786 = vpop.permute.xlu0 %785
    %v788 = vadd.f32 %v778, %v786
    %v789 = vtanh.pop %v788
    %791 = vrot.lane.b32.xlu0 %v789, 8
    %v792 = vpop.permute.xlu0 %791
    %v794 = vmul.f32 %v773, %v792
    %796 = vrot.lane.b32.xlu0 %v794, 112
    %v797 = vpop.permute.xlu0 %796
    %vm799 = vcmask 64518
    %800 = vst.msk [vmem:[#allocation4 - $0x6] sm:$0xc0] %vm799, %v797
    %802 = vrot.lane.b32.xlu0 %v788, 120
    %v803 = vpop.permute.xlu0 %802
    %805 = vst.msk [vmem:[#allocation6 - $0x6] sm:$0xc0] %vm799, %v803
    %v806 = vld [vmem:[%s6] sm:$0xff]
    %v807 = vld [vmem:[%s7] sm:$0x1]
    %v809 = vlaneseq
    %v810 = vshrl.u32 %v809, 7
    %v811 = vsub.s32 0, %v810
    %v812 = vrot.slane %v807, %v811
    %v814 = vrot.slane %v794, 6
    %815 = vrot.lane.b32.xlu0 %v814, 112
    %v816 = vpop.permute.xlu0 %815
    %vm817 = vcmask 64512
    %v818 = vsel %vm817, %v816, 0
    %820 = vmatprep.subr.mxu0 0.0
    %821 = vmatpush1.msra.mxu0 %v806
    %822 = vmatprep.subr.mxu0 0.0
    %823 = vmatpush1.msra.mxu0 0.0
    %824 = vmatprep.subr.mxu0 0.0
    %825 = vmatpush1.msra.mxu0 0.0
    %826 = vmatprep.subr.mxu0 0.0
    %827 = vmatpush1.msra.mxu0 0.0
    %828 = vmatprep.subr.mxu0 0.0
    %829 = vmatpush1.msra.mxu0 0.0
    %830 = vmatprep.subr.mxu0 0.0
    %831 = vmatpush1.msra.mxu0 0.0
    %832 = vmatprep.subr.mxu0 0.0
    %833 = vmatpush1.msra.mxu0 0.0
    %834 = vmatprep.subr.mxu0 0.0
    %835 = vmatpush1.msra.mxu0 0.0
    %836 = vmatprep.subr.mxu0 0.0
    %837 = vmatpush1.msra.mxu0 0.0
    %838 = vmatprep.subr.mxu0 0.0
    %839 = vmatpush1.msra.mxu0 0.0
    %840 = vmatprep.subr.mxu0 0.0
    %841 = vmatpush1.msra.mxu0 0.0
    %842 = vmatprep.subr.mxu0 0.0
    %843 = vmatpush1.msra.mxu0 0.0
    %844 = vmatprep.subr.mxu0 0.0
    %845 = vmatpush1.msra.mxu0 0.0
    %846 = vmatprep.subr.mxu0 0.0
    %847 = vmatpush1.msra.mxu0 0.0
    %848 = vmatprep.subr.mxu0 0.0
    %849 = vmatpush1.msra.mxu0 0.0
    %850 = vmatprep.subr.mxu0 0.0
    %851 = vmatpush1.msra.mxu0 0.0
    %852 = vmatprep.subr.mxu0 0.0
    %853 = vmatpush1.msra.mxu0 0.0
    %854 = vmatprep.subr.mxu0 0.0
    %855 = vmatpush1.msra.mxu0 0.0
    %856 = vmatprep.subr.mxu0 0.0
    %857 = vmatpush1.msra.mxu0 0.0
    %858 = vmatprep.subr.mxu0 0.0
    %859 = vmatpush1.msra.mxu0 0.0
    %860 = vmatprep.subr.mxu0 0.0
    %861 = vmatpush1.msra.mxu0 0.0
    %862 = vmatprep.subr.mxu0 0.0
    %863 = vmatpush1.msra.mxu0 0.0
    %864 = vmatprep.subr.mxu0 0.0
    %865 = vmatpush1.msra.mxu0 0.0
    %866 = vmatprep.subr.mxu0 0.0
    %867 = vmatpush1.msra.mxu0 0.0
    %868 = vmatprep.subr.mxu0 0.0
    %869 = vmatpush1.msra.mxu0 0.0
    %870 = vmatprep.subr.mxu0 0.0
    %871 = vmatpush1.msra.mxu0 0.0
    %872 = vmatprep.subr.mxu0 0.0
    %873 = vmatpush1.msra.mxu0 0.0
    %874 = vmatprep.subr.mxu0 0.0
    %875 = vmatpush1.msra.mxu0 0.0
    %876 = vmatprep.subr.mxu0 0.0
    %877 = vmatpush1.msra.mxu0 0.0
    %878 = vmatprep.subr.mxu0 0.0
    %879 = vmatpush1.msra.mxu0 0.0
    %880 = vmatprep.subr.mxu0 0.0
    %881 = vmatpush1.msra.mxu0 0.0
    %882 = vmatprep.subr.mxu0 0.0
    %883 = vmatpush1.msra.mxu0 0.0
    %884 = vmatprep.mubr.f32.mxu0 0.0
    %885 = vmatmul.mubr.f32.gmra.mrb[0].mxu0 %v818
    %v886 = vpop.f32.mrb[0].mxu0
    %v887 = vadd.f32 %v812, %v886
    %v888 = vpop.f32.mrb[0].mxu0
    %889 = vdwg.mxu0
    %890 = vst [vmem:[#allocation2] sm:$0x3] %v887
    // Predicated region
    $region34: #{network_forward.1} parent=1 // pred_check
      _
    $region35: #{network_forward.1} parent=1 // pred_check_branch
      %892 = sbr.rel (0) target = $region37
    $region36: #{network_forward.1} parent=1 // pred_region
      %s894 = ssub.s32 32, 32
      %895 = vsyncadd [#allocation3], %s894
      %s897 = sshll.u32 [#allocation2], 4
      %s898 = int_to_ptr.vmem [resolvable:$true] %s897
      %900 = dma.vmem_to_hbm [thread:$0]  %s898, 32, %s8, [#allocation3]
    $region37: #{network_forward.1} parent=1 // pred_fallthru
      _
    // Predicated region
    $region38: #{network_forward.1} parent=1 // pred_check
      _
    $region39: #{network_forward.1} parent=1 // pred_check_branch
      %902 = sbr.rel (0) target = $region41
    $region40: #{network_forward.1} parent=1 // pred_region
      %s904 = ssub.s32 32, 32
      %905 = vsyncadd [#allocation5], %s904
      %s907 = sshll.u32 [#allocation4], 4
      %s908 = int_to_ptr.vmem [resolvable:$true] %s907
      %910 = dma.vmem_to_hbm [thread:$0]  %s908, 32, %s9, [#allocation5]
    $region41: #{network_forward.1} parent=1 // pred_fallthru
      _
    // Predicated region
    $region42: #{network_forward.1} parent=1 // pred_check
      _
    $region43: #{network_forward.1} parent=1 // pred_check_branch
      %912 = sbr.rel (0) target = $region45
    $region44: #{network_forward.1} parent=1 // pred_region
      %s914 = ssub.s32 32, 32
      %915 = vsyncadd [#allocation5], %s914
      %s917 = sshll.u32 [#allocation6], 4
      %s918 = int_to_ptr.vmem [resolvable:$true] %s917
      %920 = dma.vmem_to_hbm [thread:$0]  %s918, 32, %s10, [#allocation5]
    $region45: #{network_forward.1} parent=1 // pred_fallthru
      _
    // Predicated region
    $region46: #{network_forward.1} parent=1 // pred_check
      _
    $region47: #{network_forward.1} parent=1 // pred_check_branch
      %922 = sbr.rel (0) target = $region49
    $region48: #{network_forward.1} parent=1 // pred_region
      %923 = dma.done [#allocation3], 32
    $region49: #{network_forward.1} parent=1 // pred_fallthru
      _
    // Predicated region
    $region50: #{network_forward.1} parent=1 // pred_check
      _
    $region51: #{network_forward.1} parent=1 // pred_check_branch
      %925 = sbr.rel (0) target = $region53
    $region52: #{network_forward.1} parent=1 // pred_region
      %926 = dma.done [#allocation5], 32
    $region53: #{network_forward.1} parent=1 // pred_fallthru
      _
    // Predicated region
    $region54: #{network_forward.1} parent=1 // pred_check
      _
    $region55: #{network_forward.1} parent=1 // pred_check_branch
      %928 = sbr.rel (0) target = $region57
    $region56: #{network_forward.1} parent=1 // pred_region
      %929 = dma.done [#allocation5], 32
    $region57: #{network_forward.1} parent=1 // pred_fallthru
      _
    %930 = vsyncpa [#allocation3], 1
    %931 = vsyncpa [#allocation5], 1

</llo_original>
